<compile_context>
chip_gen: v7x
topology: tpu7x:2x2x1
jax: 0.10.0
libtpu: 0.0.40
codegen_flags: <defaults>
</compile_context>

<pallas_src>
import functools

import jax
import jax.numpy as jnp
from jax import lax
from jax.experimental import pallas as pl
from jax.experimental.pallas import tpu as pltpu


def _round_up(x, m):
    return (x + m - 1) // m * m


# --------------------------- Path A: fused expert loop ---------------------------- #

def _fused_experts_kernel(n_experts,
                          active_ref,                       # SMEM (E,) int32
                          x_ref, gates_ref,                 # VMEM (tt, D), (tt, E)
                          w1_ref, b1_ref, w2_ref, b2_ref,   # VMEM (E,D,H),(E,1,H),(E,H,D),(E,1,D)
                          out_ref,                          # VMEM (tt, D) out dtype
                          acc_ref):                         # VMEM (tt, D) f32
    acc_ref[...] = jnp.zeros_like(acc_ref)
    x = x_ref[...]
    for e in range(n_experts):                              # static unroll (E is small)
        @pl.when(active_ref[e] != 0)
        def _compute(e=e):
            gate = gates_ref[:, e:e + 1]                    # (tt, 1) f32, static lane slice
            h = jnp.dot(x, w1_ref[e], preferred_element_type=jnp.float32) + b1_ref[e]
            h = jax.nn.gelu(h, approximate=True)
            y = jnp.dot(h.astype(w2_ref.dtype), w2_ref[e],
                        preferred_element_type=jnp.float32) + b2_ref[e]
            acc_ref[...] += gate * y
    out_ref[...] = acc_ref[...].astype(out_ref.dtype)       # zeros if no expert active


# ------------------- Path B: per-expert grid with H-chunk tiling ------------------ #

def _tiled_experts_kernel(active_ref, remap_ref,            # SMEM (E,), (E,) int32
                          x_ref, gates_ref,                 # VMEM (tt, D), (tt, E)
                          w1_ref, b1_ref, w2_ref, b2_ref,   # VMEM (D,th),(1,th),(th,D),(1,D)
                          out_ref,                          # VMEM (tt, D) out dtype
                          acc_ref):                         # VMEM (tt, D) f32
    del remap_ref                                           # only used by the index_maps
    e = pl.program_id(1)
    hc = pl.program_id(2)

    @pl.when(jnp.logical_and(e == 0, hc == 0))
    def _init():
        acc_ref[...] = jnp.zeros_like(acc_ref)

    # The pl.when guard is mandatory: inactive experts have their weight blocks
    # remapped (stale) so the DMA is skipped — they must never be consumed.
    @pl.when(active_ref[e] != 0)
    def _compute():
        # Select gate column `e` from the resident (tt, E) block.  (A dynamic
        # lane-dim ref slice is not reliably lowered; the fused path uses a
        # static slice instead, so this only runs in the large-config regime.)
        col = lax.broadcasted_iota(jnp.int32, gates_ref.shape, 1)
        gate = jnp.sum(jnp.where(col == e, gates_ref[...], 0.0),
                       axis=1, keepdims=True)               # (tt, 1) f32

        h = jnp.dot(x_ref[...], w1_ref[...],
                    preferred_element_type=jnp.float32) + b1_ref[...]
        h = jax.nn.gelu(h, approximate=True)
        y = jnp.dot(h.astype(w2_ref.dtype), w2_ref[...],
                    preferred_element_type=jnp.float32)

        @pl.when(hc == 0)
        def _add_b2():
            acc_ref[...] += gate * b2_ref[...]

        acc_ref[...] += gate * y

    @pl.when(jnp.logical_and(e == pl.num_programs(1) - 1,
                             hc == pl.num_programs(2) - 1))
    def _finalize():
        out_ref[...] = acc_ref[...].astype(out_ref.dtype)


# --------------------------------- combine wrapper -------------------------------- #

_VMEM_BUDGET = 40 * 1024 * 1024   # conservative: leaves headroom inside v7x's 64 MiB


def _fused_vmem_estimate(tile_t, D, H, E, cbytes, obytes):
    weights = E * 2 * D * H * cbytes + E * (H + D) * 4
    tiles = tile_t * (D * cbytes + E * 4 + D * obytes)
    scratch = tile_t * D * 4 + tile_t * H * 4
    return 2 * weights + 2 * tiles + scratch


def _tiled_vmem_estimate(tile_t, tile_h, D, E, cbytes, obytes):
    weights = 2 * D * tile_h * cbytes + (tile_h + D) * 4
    tiles = tile_t * (D * cbytes + E * 4 + D * obytes)
    scratch = tile_t * D * 4 + tile_t * tile_h * 4
    return 2 * (weights + tiles) + scratch


def moe_experts_combine(x, gates_te, w1, b1, w2, b2, *,
                        out_dtype=None, compute_dtype=None,
                        max_tile_t=512, tile_h=None, active=None,
                        force_path=None):
    """results = sum_e gates[:, e:e+1] * MLP_e(x), emitted in out_dtype.

    x: (T, D); gates_te: (T, E); w1: (E, D, H); b1: (E, 1, H); w2: (E, H, D);
    b2: (E, 1, D); active: optional (E,) expert-skip flags (derived from gates if
    omitted).  Returns (T, D) in out_dtype (default: x.dtype).
    """
    T, D = x.shape
    E, _, H = w1.shape

    if out_dtype is None:
        out_dtype = x.dtype
    if compute_dtype is None:
        compute_dtype = x.dtype
    cbytes = jnp.dtype(compute_dtype).itemsize
    obytes = jnp.dtype(out_dtype).itemsize

    x = x.astype(compute_dtype)
    w1 = w1.astype(compute_dtype)
    w2 = w2.astype(compute_dtype)
    b1 = b1.astype(jnp.float32)
    b2 = b2.astype(jnp.float32)
    gates_te = gates_te.astype(jnp.float32)

    if active is None:
        active = jnp.max(jnp.abs(gates_te), axis=0) > 0.0
    active = active.astype(jnp.int32)

    # ---- token tiling ----------------------------------------------------------
    t8 = _round_up(T, 8)
    tile_t = min(max_tile_t, t8)
    # v7x megacore: the token axis is the only "parallel" axis, so keep >= 2 tiles
    # whenever T allows it (no effect on v5e/v6e: 1 TensorCore).
    if t8 // tile_t < 2 and t8 >= 16:
        tile_t = _round_up(pl.cdiv(t8, 2), 8)

    # ---- H tiling (only used by the "tiled" path) -------------------------------
    if tile_h is None or H % tile_h != 0 or (tile_h % 128 != 0 and tile_h != H):
        tile_h = 512 if (H % 512 == 0 and H > 512) else H

    # ---- path selection under the v7x-safe VMEM budget --------------------------
    tt_fused = tile_t
    while (_fused_vmem_estimate(tt_fused, D, H, E, cbytes, obytes) > _VMEM_BUDGET
           and tt_fused > 64):
        tt_fused = _round_up(tt_fused // 2, 8)
    fused_fits = _fused_vmem_estimate(tt_fused, D, H, E, cbytes, obytes) <= _VMEM_BUDGET
    if force_path == "fused" or (force_path is None and fused_fits):
        path, tile_t = "fused", tt_fused
    else:
        path = "tiled"
        while (_tiled_vmem_estimate(tile_t, tile_h, D, E, cbytes, obytes) > _VMEM_BUDGET
               and tile_t > 64):
            tile_t = _round_up(tile_t // 2, 8)

    t_pad = _round_up(T, tile_t)
    if t_pad != T:
        x = jnp.pad(x, ((0, t_pad - T), (0, 0)))
        gates_te = jnp.pad(gates_te, ((0, t_pad - T), (0, 0)))
    num_tiles = t_pad // tile_t

    cost = pl.CostEstimate(
        flops=int(4 * t_pad * E * D * H),
        transcendentals=int(t_pad * E * H),
        bytes_accessed=int(t_pad * D * (cbytes + obytes) + t_pad * E * 4
                           + (1 if path == "fused" else num_tiles)
                           * E * (2 * D * H * cbytes + (H + D) * 4)),
    )

    if path == "fused":
        est = _fused_vmem_estimate(tile_t, D, H, E, cbytes, obytes)
        vmem_limit = int(min(max(int(1.5 * est), 32 << 20), 64 << 20))
        grid_spec = pltpu.PrefetchScalarGridSpec(
            num_scalar_prefetch=1,
            grid=(num_tiles,),
            in_specs=[
                pl.BlockSpec((tile_t, D), lambda t, act: (t, 0)),     # x
                pl.BlockSpec((tile_t, E), lambda t, act: (t, 0)),     # gates (resident cols)
                pl.BlockSpec((E, D, H), lambda t, act: (0, 0, 0)),    # w1 (DMA'd once)
                pl.BlockSpec((E, 1, H), lambda t, act: (0, 0, 0)),    # b1
                pl.BlockSpec((E, H, D), lambda t, act: (0, 0, 0)),    # w2
                pl.BlockSpec((E, 1, D), lambda t, act: (0, 0, 0)),    # b2
            ],
            out_specs=pl.BlockSpec((tile_t, D), lambda t, act: (t, 0)),
            scratch_shapes=[pltpu.VMEM((tile_t, D), jnp.float32)],
        )
        out = pl.pallas_call(
            functools.partial(_fused_experts_kernel, E),
            out_shape=jax.ShapeDtypeStruct((t_pad, D), out_dtype),
            grid_spec=grid_spec,
            compiler_params=pltpu.CompilerParams(
                dimension_semantics=("parallel",),
                vmem_limit_bytes=vmem_limit),
            cost_estimate=cost,
        )(active, x, gates_te, w1, b1, w2, b2)
    else:
        # Remap inactive experts to the most recent active one: consecutive
        # identical weight-block indices => Pallas skips the (D,H)+(H,D) DMA.
        idx = jnp.arange(E, dtype=jnp.int32)
        run_max = lax.cummax(jnp.where(active > 0, idx, -1))
        first_active = jnp.where(jnp.any(active > 0),
                                 jnp.argmax(active > 0).astype(jnp.int32),
                                 jnp.int32(0))
        remap = jnp.where(run_max < 0, first_active, run_max).astype(jnp.int32)

        n_hc = H // tile_h
        est = _tiled_vmem_estimate(tile_t, tile_h, D, E, cbytes, obytes)
        vmem_limit = int(min(max(int(1.5 * est), 32 << 20), 64 << 20))
        grid_spec = pltpu.PrefetchScalarGridSpec(
            num_scalar_prefetch=2,
            grid=(num_tiles, E, n_hc),    # token tiles | experts | H chunks (innermost)
            in_specs=[
                pl.BlockSpec((tile_t, D), lambda t, e, hc, act, rmp: (t, 0)),
                pl.BlockSpec((tile_t, E), lambda t, e, hc, act, rmp: (t, 0)),
                pl.BlockSpec((None, D, tile_h),
                             lambda t, e, hc, act, rmp: (rmp[e], 0, hc)),
                pl.BlockSpec((None, 1, tile_h),
                             lambda t, e, hc, act, rmp: (rmp[e], 0, hc)),
                pl.BlockSpec((None, tile_h, D),
                             lambda t, e, hc, act, rmp: (rmp[e], hc, 0)),
                pl.BlockSpec((None, 1, D),
                             lambda t, e, hc, act, rmp: (rmp[e], 0, 0)),
            ],
            out_specs=pl.BlockSpec((tile_t, D), lambda t, e, hc, act, rmp: (t, 0)),
            scratch_shapes=[pltpu.VMEM((tile_t, D), jnp.float32)],
        )
        out = pl.pallas_call(
            _tiled_experts_kernel,
            out_shape=jax.ShapeDtypeStruct((t_pad, D), out_dtype),
            grid_spec=grid_spec,
            compiler_params=pltpu.CompilerParams(
                dimension_semantics=("parallel", "arbitrary", "arbitrary"),
                vmem_limit_bytes=vmem_limit),
            cost_estimate=cost,
        )(active, remap, x, gates_te, w1, b1, w2, b2)

    return out[:T]


# --------------------------------- forward glue ---------------------------------- #

def masked_moe_forward(inputs, mask, params, *, top_k,
                       softmax_order="softmax_topk",
                       compute_dtype=None, max_tile_t=512,
                       tile_h=None, force_path=None):
    B, S, D = inputs.shape
    x = inputs.reshape(-1, D)                                   # (T, D)
    T = x.shape[0]
    E = params["wr"].shape[1]                                   # real experts

    # Router + mask in XLA (lane-sparse (T, E) — fused with softmax / top-k glue).
    logits = (x.astype(jnp.float32) @ params["wr"].astype(jnp.float32)) \
        * mask.astype(jnp.float32)[None, :]
    sum_of_logits = jnp.sum(logits)

    # Append the DummyExpert's zero logit (index E).
    logits_full = jnp.concatenate(
        [logits, jnp.zeros((T, 1), logits.dtype)], axis=1)      # (T, E+1)

    if softmax_order == "softmax_topk":
        all_probs = jax.nn.softmax(logits_full, axis=1)
        weights, selected_experts = lax.top_k(all_probs, top_k)
    elif softmax_order == "topk_softmax":
        weights, selected_experts = lax.top_k(logits_full, top_k)
        weights = jax.nn.softmax(weights, axis=-1)
    else:
        raise ValueError(f"Unknown softmax_order: {softmax_order}")

    # Dense per-token combine weights over the E real experts (dummy column dropped).
    onehot = jax.nn.one_hot(selected_experts, E + 1, dtype=weights.dtype)  # (T,K,E+1)
    gates = jnp.sum(weights[:, :, None] * onehot, axis=1)[:, :E]           # (T, E)

    # Expert-skip flags come from the routing decisions already computed (no extra
    # pass over gates).  TODO(synk): the reference degenerate branch
    # (sum_of_logits < 1e-20) is ill-formed torch; we implement its intent — route
    # everything to the DummyExpert => zero output — by deactivating all experts.
    active = jnp.sum(onehot[..., :E], axis=(0, 1)) > 0
    active = jnp.logical_and(active, sum_of_logits >= 1e-20).astype(jnp.int32)

    results = moe_experts_combine(
        x, gates, params["w1"], params["b1"], params["w2"], params["b2"],
        out_dtype=inputs.dtype, compute_dtype=compute_dtype,
        max_tile_t=max_tile_t, tile_h=tile_h, active=active,
        force_path=force_path)

    aux = {"router_logits": logits_full, "selected_experts": selected_experts}
    return results.reshape(inputs.shape), aux


# ----------------------------- pure-JAX references -------------------------------- #

def _ref_experts_combine(x, gates, w1, b1, w2, b2):
    x = x.astype(jnp.float32)
    out = jnp.zeros_like(x)
    for e in range(w1.shape[0]):
        h = jax.nn.gelu(x @ w1[e].astype(jnp.float32) + b1[e].astype(jnp.float32),
                        approximate=True)
        y = h @ w2[e].astype(jnp.float32) + b2[e].astype(jnp.float32)
        out = out + gates[:, e:e + 1].astype(jnp.float32) * y
    return out


def _ref_forward(inputs, mask, params, *, top_k, softmax_order="softmax_topk"):
    B, S, D = inputs.shape
    x = inputs.reshape(-1, D).astype(jnp.float32)
    T = x.shape[0]
    E = params["wr"].shape[1]
    logits = (x @ params["wr"].astype(jnp.float32)) * mask.astype(jnp.float32)[None, :]
    sum_of_logits = jnp.sum(logits)
    logits_full = jnp.concatenate([logits, jnp.zeros((T, 1), logits.dtype)], axis=1)
    if softmax_order == "softmax_topk":
        probs = jax.nn.softmax(logits_full, axis=1)
        weights, sel = lax.top_k(probs, top_k)
    else:
        weights, sel = lax.top_k(logits_full, top_k)
        weights = jax.nn.softmax(weights, axis=-1)
    onehot = jax.nn.one_hot(sel, E + 1, dtype=weights.dtype)
    gates = jnp.sum(weights[:, :, None] * onehot, axis=1)[:, :E]
    gates = jnp.where(sum_of_logits < 1e-20, jnp.zeros_like(gates), gates)
    results = _ref_experts_combine(x, gates, params["w1"], params["b1"],
                                   params["w2"], params["b2"])
    return results.reshape(inputs.shape)


def _make_params(key, D, E, H):
    k_wr, k_w1, k_b1, k_w2, k_b2 = jax.random.split(key, 5)
    return {
        "wr": jax.random.normal(k_wr, (D, E), dtype=jnp.float32) / jnp.sqrt(D),
        "w1": jax.random.normal(k_w1, (E, D, H), dtype=jnp.float32) / jnp.sqrt(D),
        "b1": 0.01 * jax.random.normal(k_b1, (E, 1, H), dtype=jnp.float32),
        "w2": jax.random.normal(k_w2, (E, H, D), dtype=jnp.float32) / jnp.sqrt(H),
        "b2": 0.01 * jax.random.normal(k_b2, (E, 1, D), dtype=jnp.float32),
    }


# --------------------------------------- main ------------------------------------- #

if __name__ == "__main__":
    key = jax.random.PRNGKey(0)
    k_a, k_b, k_g = jax.random.split(key, 3)

    # ---------------- Config A: module-sized demo (fused path) ---------------- #
    B, S, D = 2, 8, 32
    E, H, TOP_K = 4, 64, 2
    k_in, k_p = jax.random.split(k_a)
    inputs = jax.random.normal(k_in, (B, S, D), dtype=jnp.float32)
    mask = jnp.array([1.0, 1.0, 0.0, 1.0], dtype=jnp.float32)
    params = _make_params(k_p, D, E, H)
    # Keep the non-degenerate routing path exercised (signed sum-of-logits check).
    if float(jnp.sum((inputs.reshape(-1, D) @ params["wr"]) * mask[None, :])) <= 0.0:
        params["wr"] = -params["wr"]

    fwd = functools.partial(masked_moe_forward, top_k=TOP_K,
                            softmax_order="softmax_topk")
    ref = _ref_forward(inputs, mask, params, top_k=TOP_K)

    # 1) f32 compute path (matches torch default dtype); output in input dtype.
    out_f32, aux = fwd(inputs, mask, params)
    jax.block_until_ready(out_f32)
    assert out_f32.shape == inputs.shape and out_f32.dtype == inputs.dtype
    assert aux["selected_experts"].shape == (B * S, TOP_K)
    assert jnp.allclose(out_f32, ref, rtol=2e-2, atol=2e-2), "f32 mismatch vs reference"

    # 2) bf16 MXU path (recommended on all generations), f32 accumulation/routing.
    out_bf16c, _ = fwd(inputs, mask, params, compute_dtype=jnp.bfloat16)
    jax.block_until_ready(out_bf16c)
    assert jnp.allclose(out_bf16c, ref, rtol=1e-1, atol=1e-1), "bf16 compute mismatch"

    # 3) bf16 inputs -> bf16 output straight from the kernel (f32 scratch accum).
    inputs_bf16 = inputs.astype(jnp.bfloat16)
    out_bf16, _ = fwd(inputs_bf16, mask, params)
    jax.block_until_ready(out_bf16)
    assert out_bf16.dtype == jnp.bfloat16
    assert jnp.allclose(out_bf16.astype(jnp.float32),
                        _ref_forward(inputs_bf16, mask, params, top_k=TOP_K),
                        rtol=2e-1, atol=2e-1), "bf16 output mismatch"

    # 4) Degenerate branch: all experts masked out -> DummyExpert -> zeros.
    out_zero, _ = fwd(inputs, jnp.zeros_like(mask), params)
    jax.block_until_ready(out_zero)
    assert jnp.allclose(out_zero, jnp.zeros_like(out_zero)), "degenerate branch not zero"

    # ------------- Config B: larger shapes (tiled path + H-chunking) ------------ #
    B2, S2, D2, E2, H2 = 2, 32, 128, 4, 256
    k_in2, k_p2 = jax.random.split(k_b)
    inputs2 = jax.random.normal(k_in2, (B2, S2, D2), dtype=jnp.float32)
    mask2 = jnp.array([1.0, 0.0, 1.0, 1.0], dtype=jnp.float32)
    params2 = _make_params(k_p2, D2, E2, H2)
    if float(jnp.sum((inputs2.reshape(-1, D2) @ params2["wr"]) * mask2[None, :])) <= 0.0:
        params2["wr"] = -params2["wr"]

    out2, _ = masked_moe_forward(inputs2, mask2, params2, top_k=TOP_K,
                                 force_path="tiled", tile_h=128)
    jax.block_until_ready(out2)
    ref2 = _ref_forward(inputs2, mask2, params2, top_k=TOP_K)
    assert jnp.allclose(out2, ref2, rtol=5e-2, atol=5e-2), "tiled-path mismatch"

    # 5) Tiled path with a fully inactive expert column (exercises the weight-DMA
    #    skip remap) via a direct call to the combine wrapper.
    x2 = inputs2.reshape(-1, D2)
    gates_direct = jax.nn.softmax(jax.random.normal(k_g, (x2.shape[0], E2)), axis=-1)
    gates_direct = gates_direct.at[:, 1].set(0.0)          # expert 1 never used
    out_direct = moe_experts_combine(
        x2, gates_direct, params2["w1"], params2["b1"], params2["w2"], params2["b2"],
        force_path="tiled", tile_h=128)
    jax.block_until_ready(out_direct)
    ref_direct = _ref_experts_combine(x2, gates_direct, params2["w1"], params2["b1"],
                                      params2["w2"], params2["b2"])
    assert jnp.allclose(out_direct, ref_direct, rtol=5e-2, atol=5e-2), \
        "DMA-skip remap mismatch"

    print("KERNEL_OK")
</pallas_src>

<mosaic_0001>
module attributes {stable_mosaic.version = 11 : i64} {
  func.func @_fused_experts_kernel(%arg0: i32, %arg1: memref<4xi32, #tpu.memory_space<smem>>, %arg2: memref<8x32xf32, #tpu.memory_space<vmem>>, %arg3: memref<8x4xf32, #tpu.memory_space<vmem>>, %arg4: memref<4x32x64xf32, #tpu.memory_space<vmem>>, %arg5: memref<4x1x64xf32, #tpu.memory_space<vmem>>, %arg6: memref<4x64x32xf32, #tpu.memory_space<vmem>>, %arg7: memref<4x1x32xf32, #tpu.memory_space<vmem>>, %arg8: memref<8x32xf32, #tpu.memory_space<vmem>>, %arg9: memref<8x32xf32, #tpu.memory_space<vmem>>) attributes {dimension_semantics = [#tpu.dimension_semantics<parallel>], iteration_bounds = array<i64: 2>, scalar_prefetch = 1 : i64, scratch_operands = 1 : i64, tpu.core_type = #tpu.core_type<tc>, window_params = [{transform_indices = @transform_0, window_bounds = array<i64: 8, 32>}, {transform_indices = @transform_1, window_bounds = array<i64: 8, 4>}, {pipeline_mode = #tpu.pipeline_mode<synchronous>, transform_indices = @transform_2, window_bounds = array<i64: 4, 32, 64>}, {pipeline_mode = #tpu.pipeline_mode<synchronous>, transform_indices = @transform_3, window_bounds = array<i64: 4, 1, 64>}, {pipeline_mode = #tpu.pipeline_mode<synchronous>, transform_indices = @transform_4, window_bounds = array<i64: 4, 64, 32>}, {pipeline_mode = #tpu.pipeline_mode<synchronous>, transform_indices = @transform_5, window_bounds = array<i64: 4, 1, 32>}, {transform_indices = @transform_6, window_bounds = array<i64: 8, 32>}]} {
    %cst = arith.constant 0.000000e+00 : f32
    %0 = vector.broadcast %cst : f32 to vector<8x32xf32>
    %c0 = arith.constant 0 : index
    %c0_0 = arith.constant 0 : index
    %1 = vector.load %arg9[%c0, %c0_0] : memref<8x32xf32, #tpu.memory_space<vmem>>, vector<8x32xf32>
    tpu.vector_store %arg9[%c0, %c0_0], %0 {strides = array<i32>} : memref<8x32xf32, #tpu.memory_space<vmem>>, vector<8x32xf32>,
    %c0_1 = arith.constant 0 : index
    %c0_2 = arith.constant 0 : index
    %2 = vector.load %arg2[%c0_1, %c0_2] : memref<8x32xf32, #tpu.memory_space<vmem>>, vector<8x32xf32>
    %c0_3 = arith.constant 0 : index
    %3 = memref.load %arg1[%c0_3] : memref<4xi32, #tpu.memory_space<smem>>
    %c0_i32 = arith.constant 0 : i32
    %4 = arith.cmpi ne, %3, %c0_i32 : i32
    %5 = arith.extui %4 : i1 to i32
    %c0_i32_4 = arith.constant 0 : i32
    %6 = arith.cmpi ne, %5, %c0_i32_4 : i32
    scf.if %6 {
      %c0_15 = arith.constant 0 : index
      %c0_16 = arith.constant 0 : index
      %21 = vector.load %arg3[%c0_15, %c0_16] : memref<8x4xf32, #tpu.memory_space<vmem>>, vector<8x1xf32>
      %c0_17 = arith.constant 0 : index
      %c0_18 = arith.constant 0 : index
      %c0_19 = arith.constant 0 : index
      %22 = vector.load %arg4[%c0_17, %c0_18, %c0_19] : memref<4x32x64xf32, #tpu.memory_space<vmem>>, vector<1x32x64xf32>
      %23 = vector.shape_cast %22 : vector<1x32x64xf32> to vector<32x64xf32>
      %cst_20 = arith.constant dense<0.000000e+00> : vector<8x64xf32>
      %24 = tpu.matmul %2, %23, %cst_20 {dimension_numbers = #tpu.dot_dimension_numbers<[1], [0], [0], [1], [0, 0, 1, 1], [], []>} : vector<8x32xf32>, vector<32x64xf32>, vector<8x64xf32> -> vector<8x64xf32>
      %c0_21 = arith.constant 0 : index
      %c0_22 = arith.constant 0 : index
      %c0_23 = arith.constant 0 : index
      %25 = vector.load %arg5[%c0_21, %c0_22, %c0_23] : memref<4x1x64xf32, #tpu.memory_space<vmem>>, vector<1x1x64xf32>
      %26 = vector.shape_cast %25 : vector<1x1x64xf32> to vector<1x64xf32>
      %27 = vector.broadcast %26 : vector<1x64xf32> to vector<8x64xf32>
      %28 = arith.addf %24, %27 : vector<8x64xf32>
      %29 = arith.mulf %28, %28 : vector<8x64xf32>
      %30 = arith.mulf %28, %29 : vector<8x64xf32>
      %cst_24 = arith.constant 4.471500e-02 : f32
      %31 = vector.broadcast %cst_24 : f32 to vector<8x64xf32>
      %32 = arith.mulf %31, %30 : vector<8x64xf32>
      %33 = arith.addf %28, %32 : vector<8x64xf32>
      %cst_25 = arith.constant 0.797884583 : f32
      %34 = vector.broadcast %cst_25 : f32 to vector<8x64xf32>
      %35 = arith.mulf %34, %33 : vector<8x64xf32>
      %36 = math.tanh %35 : vector<8x64xf32>
      %cst_26 = arith.constant 1.000000e+00 : f32
      %37 = vector.broadcast %cst_26 : f32 to vector<8x64xf32>
      %38 = arith.addf %37, %36 : vector<8x64xf32>
      %cst_27 = arith.constant 5.000000e-01 : f32
      %39 = vector.broadcast %cst_27 : f32 to vector<8x64xf32>
      %40 = arith.mulf %39, %38 : vector<8x64xf32>
      %41 = arith.mulf %28, %40 : vector<8x64xf32>
      %c0_28 = arith.constant 0 : index
      %c0_29 = arith.constant 0 : index
      %c0_30 = arith.constant 0 : index
      %42 = vector.load %arg6[%c0_28, %c0_29, %c0_30] : memref<4x64x32xf32, #tpu.memory_space<vmem>>, vector<1x64x32xf32>
      %43 = vector.shape_cast %42 : vector<1x64x32xf32> to vector<64x32xf32>
      %cst_31 = arith.constant dense<0.000000e+00> : vector<8x32xf32>
      %44 = tpu.matmul %41, %43, %cst_31 {dimension_numbers = #tpu.dot_dimension_numbers<[1], [0], [0], [1], [0, 0, 1, 1], [], []>} : vector<8x64xf32>, vector<64x32xf32>, vector<8x32xf32> -> vector<8x32xf32>
      %c0_32 = arith.constant 0 : index
      %c0_33 = arith.constant 0 : index
      %c0_34 = arith.constant 0 : index
      %45 = vector.load %arg7[%c0_32, %c0_33, %c0_34] : memref<4x1x32xf32, #tpu.memory_space<vmem>>, vector<1x1x32xf32>
      %46 = vector.shape_cast %45 : vector<1x1x32xf32> to vector<1x32xf32>
      %47 = vector.broadcast %46 : vector<1x32xf32> to vector<8x32xf32>
      %48 = arith.addf %44, %47 : vector<8x32xf32>
      %c0_35 = arith.constant 0 : index
      %c0_36 = arith.constant 0 : index
      %49 = vector.load %arg9[%c0_35, %c0_36] : memref<8x32xf32, #tpu.memory_space<vmem>>, vector<8x32xf32>
      %50 = vector.broadcast %21 : vector<8x1xf32> to vector<8x32xf32>
      %51 = arith.mulf %50, %48 : vector<8x32xf32>
      %52 = arith.addf %49, %51 : vector<8x32xf32>
      %c0_37 = arith.constant 0 : index
      %c0_38 = arith.constant 0 : index
      %53 = vector.load %arg9[%c0_37, %c0_38] : memref<8x32xf32, #tpu.memory_space<vmem>>, vector<8x32xf32>
      tpu.vector_store %arg9[%c0_37, %c0_38], %52 {strides = array<i32>} : memref<8x32xf32, #tpu.memory_space<vmem>>, vector<8x32xf32>,
    } else {
    }
    %c1 = arith.constant 1 : index
    %7 = memref.load %arg1[%c1] : memref<4xi32, #tpu.memory_space<smem>>
    %c0_i32_5 = arith.constant 0 : i32
    %8 = arith.cmpi ne, %7, %c0_i32_5 : i32
    %9 = arith.extui %8 : i1 to i32
    %c0_i32_6 = arith.constant 0 : i32
    %10 = arith.cmpi ne, %9, %c0_i32_6 : i32
    scf.if %10 {
      %c0_15 = arith.constant 0 : index
      %c1_16 = arith.constant 1 : index
      %21 = vector.load %arg3[%c0_15, %c1_16] : memref<8x4xf32, #tpu.memory_space<vmem>>, vector<8x1xf32>
      %c1_17 = arith.constant 1 : index
      %c0_18 = arith.constant 0 : index
      %c0_19 = arith.constant 0 : index
      %22 = vector.load %arg4[%c1_17, %c0_18, %c0_19] : memref<4x32x64xf32, #tpu.memory_space<vmem>>, vector<1x32x64xf32>
      %23 = vector.shape_cast %22 : vector<1x32x64xf32> to vector<32x64xf32>
      %cst_20 = arith.constant dense<0.000000e+00> : vector<8x64xf32>
      %24 = tpu.matmul %2, %23, %cst_20 {dimension_numbers = #tpu.dot_dimension_numbers<[1], [0], [0], [1], [0, 0, 1, 1], [], []>} : vector<8x32xf32>, vector<32x64xf32>, vector<8x64xf32> -> vector<8x64xf32>
      %c1_21 = arith.constant 1 : index
      %c0_22 = arith.constant 0 : index
      %c0_23 = arith.constant 0 : index
      %25 = vector.load %arg5[%c1_21, %c0_22, %c0_23] : memref<4x1x64xf32, #tpu.memory_space<vmem>>, vector<1x1x64xf32>
      %26 = vector.shape_cast %25 : vector<1x1x64xf32> to vector<1x64xf32>
      %27 = vector.broadcast %26 : vector<1x64xf32> to vector<8x64xf32>
      %28 = arith.addf %24, %27 : vector<8x64xf32>
      %29 = arith.mulf %28, %28 : vector<8x64xf32>
      %30 = arith.mulf %28, %29 : vector<8x64xf32>
      %cst_24 = arith.constant 4.471500e-02 : f32
      %31 = vector.broadcast %cst_24 : f32 to vector<8x64xf32>
      %32 = arith.mulf %31, %30 : vector<8x64xf32>
      %33 = arith.addf %28, %32 : vector<8x64xf32>
      %cst_25 = arith.constant 0.797884583 : f32
      %34 = vector.broadcast %cst_25 : f32 to vector<8x64xf32>
      %35 = arith.mulf %34, %33 : vector<8x64xf32>
      %36 = math.tanh %35 : vector<8x64xf32>
      %cst_26 = arith.constant 1.000000e+00 : f32
      %37 = vector.broadcast %cst_26 : f32 to vector<8x64xf32>
      %38 = arith.addf %37, %36 : vector<8x64xf32>
      %cst_27 = arith.constant 5.000000e-01 : f32
      %39 = vector.broadcast %cst_27 : f32 to vector<8x64xf32>
      %40 = arith.mulf %39, %38 : vector<8x64xf32>
      %41 = arith.mulf %28, %40 : vector<8x64xf32>
      %c1_28 = arith.constant 1 : index
      %c0_29 = arith.constant 0 : index
      %c0_30 = arith.constant 0 : index
      %42 = vector.load %arg6[%c1_28, %c0_29, %c0_30] : memref<4x64x32xf32, #tpu.memory_space<vmem>>, vector<1x64x32xf32>
      %43 = vector.shape_cast %42 : vector<1x64x32xf32> to vector<64x32xf32>
      %cst_31 = arith.constant dense<0.000000e+00> : vector<8x32xf32>
      %44 = tpu.matmul %41, %43, %cst_31 {dimension_numbers = #tpu.dot_dimension_numbers<[1], [0], [0], [1], [0, 0, 1, 1], [], []>} : vector<8x64xf32>, vector<64x32xf32>, vector<8x32xf32> -> vector<8x32xf32>
      %c1_32 = arith.constant 1 : index
      %c0_33 = arith.constant 0 : index
      %c0_34 = arith.constant 0 : index
      %45 = vector.load %arg7[%c1_32, %c0_33, %c0_34] : memref<4x1x32xf32, #tpu.memory_space<vmem>>, vector<1x1x32xf32>
      %46 = vector.shape_cast %45 : vector<1x1x32xf32> to vector<1x32xf32>
      %47 = vector.broadcast %46 : vector<1x32xf32> to vector<8x32xf32>
      %48 = arith.addf %44, %47 : vector<8x32xf32>
      %c0_35 = arith.constant 0 : index
      %c0_36 = arith.constant 0 : index
      %49 = vector.load %arg9[%c0_35, %c0_36] : memref<8x32xf32, #tpu.memory_space<vmem>>, vector<8x32xf32>
      %50 = vector.broadcast %21 : vector<8x1xf32> to vector<8x32xf32>
      %51 = arith.mulf %50, %48 : vector<8x32xf32>
      %52 = arith.addf %49, %51 : vector<8x32xf32>
      %c0_37 = arith.constant 0 : index
      %c0_38 = arith.constant 0 : index
      %53 = vector.load %arg9[%c0_37, %c0_38] : memref<8x32xf32, #tpu.memory_space<vmem>>, vector<8x32xf32>
      tpu.vector_store %arg9[%c0_37, %c0_38], %52 {strides = array<i32>} : memref<8x32xf32, #tpu.memory_space<vmem>>, vector<8x32xf32>,
    } else {
    }
    %c2 = arith.constant 2 : index
    %11 = memref.load %arg1[%c2] : memref<4xi32, #tpu.memory_space<smem>>
    %c0_i32_7 = arith.constant 0 : i32
    %12 = arith.cmpi ne, %11, %c0_i32_7 : i32
    %13 = arith.extui %12 : i1 to i32
    %c0_i32_8 = arith.constant 0 : i32
    %14 = arith.cmpi ne, %13, %c0_i32_8 : i32
    scf.if %14 {
      %c0_15 = arith.constant 0 : index
      %c2_16 = arith.constant 2 : index
      %21 = vector.load %arg3[%c0_15, %c2_16] : memref<8x4xf32, #tpu.memory_space<vmem>>, vector<8x1xf32>
      %c2_17 = arith.constant 2 : index
      %c0_18 = arith.constant 0 : index
      %c0_19 = arith.constant 0 : index
      %22 = vector.load %arg4[%c2_17, %c0_18, %c0_19] : memref<4x32x64xf32, #tpu.memory_space<vmem>>, vector<1x32x64xf32>
      %23 = vector.shape_cast %22 : vector<1x32x64xf32> to vector<32x64xf32>
      %cst_20 = arith.constant dense<0.000000e+00> : vector<8x64xf32>
      %24 = tpu.matmul %2, %23, %cst_20 {dimension_numbers = #tpu.dot_dimension_numbers<[1], [0], [0], [1], [0, 0, 1, 1], [], []>} : vector<8x32xf32>, vector<32x64xf32>, vector<8x64xf32> -> vector<8x64xf32>
      %c2_21 = arith.constant 2 : index
      %c0_22 = arith.constant 0 : index
      %c0_23 = arith.constant 0 : index
      %25 = vector.load %arg5[%c2_21, %c0_22, %c0_23] : memref<4x1x64xf32, #tpu.memory_space<vmem>>, vector<1x1x64xf32>
      %26 = vector.shape_cast %25 : vector<1x1x64xf32> to vector<1x64xf32>
      %27 = vector.broadcast %26 : vector<1x64xf32> to vector<8x64xf32>
      %28 = arith.addf %24, %27 : vector<8x64xf32>
      %29 = arith.mulf %28, %28 : vector<8x64xf32>
      %30 = arith.mulf %28, %29 : vector<8x64xf32>
      %cst_24 = arith.constant 4.471500e-02 : f32
      %31 = vector.broadcast %cst_24 : f32 to vector<8x64xf32>
      %32 = arith.mulf %31, %30 : vector<8x64xf32>
      %33 = arith.addf %28, %32 : vector<8x64xf32>
      %cst_25 = arith.constant 0.797884583 : f32
      %34 = vector.broadcast %cst_25 : f32 to vector<8x64xf32>
      %35 = arith.mulf %34, %33 : vector<8x64xf32>
      %36 = math.tanh %35 : vector<8x64xf32>
      %cst_26 = arith.constant 1.000000e+00 : f32
      %37 = vector.broadcast %cst_26 : f32 to vector<8x64xf32>
      %38 = arith.addf %37, %36 : vector<8x64xf32>
      %cst_27 = arith.constant 5.000000e-01 : f32
      %39 = vector.broadcast %cst_27 : f32 to vector<8x64xf32>
      %40 = arith.mulf %39, %38 : vector<8x64xf32>
      %41 = arith.mulf %28, %40 : vector<8x64xf32>
      %c2_28 = arith.constant 2 : index
      %c0_29 = arith.constant 0 : index
      %c0_30 = arith.constant 0 : index
      %42 = vector.load %arg6[%c2_28, %c0_29, %c0_30] : memref<4x64x32xf32, #tpu.memory_space<vmem>>, vector<1x64x32xf32>
      %43 = vector.shape_cast %42 : vector<1x64x32xf32> to vector<64x32xf32>
      %cst_31 = arith.constant dense<0.000000e+00> : vector<8x32xf32>
      %44 = tpu.matmul %41, %43, %cst_31 {dimension_numbers = #tpu.dot_dimension_numbers<[1], [0], [0], [1], [0, 0, 1, 1], [], []>} : vector<8x64xf32>, vector<64x32xf32>, vector<8x32xf32> -> vector<8x32xf32>
      %c2_32 = arith.constant 2 : index
      %c0_33 = arith.constant 0 : index
      %c0_34 = arith.constant 0 : index
      %45 = vector.load %arg7[%c2_32, %c0_33, %c0_34] : memref<4x1x32xf32, #tpu.memory_space<vmem>>, vector<1x1x32xf32>
      %46 = vector.shape_cast %45 : vector<1x1x32xf32> to vector<1x32xf32>
      %47 = vector.broadcast %46 : vector<1x32xf32> to vector<8x32xf32>
      %48 = arith.addf %44, %47 : vector<8x32xf32>
      %c0_35 = arith.constant 0 : index
      %c0_36 = arith.constant 0 : index
      %49 = vector.load %arg9[%c0_35, %c0_36] : memref<8x32xf32, #tpu.memory_space<vmem>>, vector<8x32xf32>
      %50 = vector.broadcast %21 : vector<8x1xf32> to vector<8x32xf32>
      %51 = arith.mulf %50, %48 : vector<8x32xf32>
      %52 = arith.addf %49, %51 : vector<8x32xf32>
      %c0_37 = arith.constant 0 : index
      %c0_38 = arith.constant 0 : index
      %53 = vector.load %arg9[%c0_37, %c0_38] : memref<8x32xf32, #tpu.memory_space<vmem>>, vector<8x32xf32>
      tpu.vector_store %arg9[%c0_37, %c0_38], %52 {strides = array<i32>} : memref<8x32xf32, #tpu.memory_space<vmem>>, vector<8x32xf32>,
    } else {
    }
    %c3 = arith.constant 3 : index
    %15 = memref.load %arg1[%c3] : memref<4xi32, #tpu.memory_space<smem>>
    %c0_i32_9 = arith.constant 0 : i32
    %16 = arith.cmpi ne, %15, %c0_i32_9 : i32
    %17 = arith.extui %16 : i1 to i32
    %c0_i32_10 = arith.constant 0 : i32
    %18 = arith.cmpi ne, %17, %c0_i32_10 : i32
    scf.if %18 {
      %c0_15 = arith.constant 0 : index
      %c3_16 = arith.constant 3 : index
      %21 = vector.load %arg3[%c0_15, %c3_16] : memref<8x4xf32, #tpu.memory_space<vmem>>, vector<8x1xf32>
      %c3_17 = arith.constant 3 : index
      %c0_18 = arith.constant 0 : index
      %c0_19 = arith.constant 0 : index
      %22 = vector.load %arg4[%c3_17, %c0_18, %c0_19] : memref<4x32x64xf32, #tpu.memory_space<vmem>>, vector<1x32x64xf32>
      %23 = vector.shape_cast %22 : vector<1x32x64xf32> to vector<32x64xf32>
      %cst_20 = arith.constant dense<0.000000e+00> : vector<8x64xf32>
      %24 = tpu.matmul %2, %23, %cst_20 {dimension_numbers = #tpu.dot_dimension_numbers<[1], [0], [0], [1], [0, 0, 1, 1], [], []>} : vector<8x32xf32>, vector<32x64xf32>, vector<8x64xf32> -> vector<8x64xf32>
      %c3_21 = arith.constant 3 : index
      %c0_22 = arith.constant 0 : index
      %c0_23 = arith.constant 0 : index
      %25 = vector.load %arg5[%c3_21, %c0_22, %c0_23] : memref<4x1x64xf32, #tpu.memory_space<vmem>>, vector<1x1x64xf32>
      %26 = vector.shape_cast %25 : vector<1x1x64xf32> to vector<1x64xf32>
      %27 = vector.broadcast %26 : vector<1x64xf32> to vector<8x64xf32>
      %28 = arith.addf %24, %27 : vector<8x64xf32>
      %29 = arith.mulf %28, %28 : vector<8x64xf32>
      %30 = arith.mulf %28, %29 : vector<8x64xf32>
      %cst_24 = arith.constant 4.471500e-02 : f32
      %31 = vector.broadcast %cst_24 : f32 to vector<8x64xf32>
      %32 = arith.mulf %31, %30 : vector<8x64xf32>
      %33 = arith.addf %28, %32 : vector<8x64xf32>
      %cst_25 = arith.constant 0.797884583 : f32
      %34 = vector.broadcast %cst_25 : f32 to vector<8x64xf32>
      %35 = arith.mulf %34, %33 : vector<8x64xf32>
      %36 = math.tanh %35 : vector<8x64xf32>
      %cst_26 = arith.constant 1.000000e+00 : f32
      %37 = vector.broadcast %cst_26 : f32 to vector<8x64xf32>
      %38 = arith.addf %37, %36 : vector<8x64xf32>
      %cst_27 = arith.constant 5.000000e-01 : f32
      %39 = vector.broadcast %cst_27 : f32 to vector<8x64xf32>
      %40 = arith.mulf %39, %38 : vector<8x64xf32>
      %41 = arith.mulf %28, %40 : vector<8x64xf32>
      %c3_28 = arith.constant 3 : index
      %c0_29 = arith.constant 0 : index
      %c0_30 = arith.constant 0 : index
      %42 = vector.load %arg6[%c3_28, %c0_29, %c0_30] : memref<4x64x32xf32, #tpu.memory_space<vmem>>, vector<1x64x32xf32>
      %43 = vector.shape_cast %42 : vector<1x64x32xf32> to vector<64x32xf32>
      %cst_31 = arith.constant dense<0.000000e+00> : vector<8x32xf32>
      %44 = tpu.matmul %41, %43, %cst_31 {dimension_numbers = #tpu.dot_dimension_numbers<[1], [0], [0], [1], [0, 0, 1, 1], [], []>} : vector<8x64xf32>, vector<64x32xf32>, vector<8x32xf32> -> vector<8x32xf32>
      %c3_32 = arith.constant 3 : index
      %c0_33 = arith.constant 0 : index
      %c0_34 = arith.constant 0 : index
      %45 = vector.load %arg7[%c3_32, %c0_33, %c0_34] : memref<4x1x32xf32, #tpu.memory_space<vmem>>, vector<1x1x32xf32>
      %46 = vector.shape_cast %45 : vector<1x1x32xf32> to vector<1x32xf32>
      %47 = vector.broadcast %46 : vector<1x32xf32> to vector<8x32xf32>
      %48 = arith.addf %44, %47 : vector<8x32xf32>
      %c0_35 = arith.constant 0 : index
      %c0_36 = arith.constant 0 : index
      %49 = vector.load %arg9[%c0_35, %c0_36] : memref<8x32xf32, #tpu.memory_space<vmem>>, vector<8x32xf32>
      %50 = vector.broadcast %21 : vector<8x1xf32> to vector<8x32xf32>
      %51 = arith.mulf %50, %48 : vector<8x32xf32>
      %52 = arith.addf %49, %51 : vector<8x32xf32>
      %c0_37 = arith.constant 0 : index
      %c0_38 = arith.constant 0 : index
      %53 = vector.load %arg9[%c0_37, %c0_38] : memref<8x32xf32, #tpu.memory_space<vmem>>, vector<8x32xf32>
      tpu.vector_store %arg9[%c0_37, %c0_38], %52 {strides = array<i32>} : memref<8x32xf32, #tpu.memory_space<vmem>>, vector<8x32xf32>,
    } else {
    }
    %c0_11 = arith.constant 0 : index
    %c0_12 = arith.constant 0 : index
    %19 = vector.load %arg9[%c0_11, %c0_12] : memref<8x32xf32, #tpu.memory_space<vmem>>, vector<8x32xf32>
    %c0_13 = arith.constant 0 : index
    %c0_14 = arith.constant 0 : index
    %20 = vector.load %arg8[%c0_13, %c0_14] : memref<8x32xf32, #tpu.memory_space<vmem>>, vector<8x32xf32>
    tpu.vector_store %arg8[%c0_13, %c0_14], %19 {strides = array<i32>} : memref<8x32xf32, #tpu.memory_space<vmem>>, vector<8x32xf32>,
    return
  }
  func.func @transform_0(%arg0: i32, %arg1: memref<4xi32, #tpu.memory_space<smem>>) -> (i32, i32) {
    %c0_i32 = arith.constant 0 : i32
    %c0_i32_0 = arith.constant 0 : i32
    return %arg0, %c0_i32 : i32, i32
  }
  func.func @transform_1(%arg0: i32, %arg1: memref<4xi32, #tpu.memory_space<smem>>) -> (i32, i32) {
    %c0_i32 = arith.constant 0 : i32
    %c0_i32_0 = arith.constant 0 : i32
    return %arg0, %c0_i32 : i32, i32
  }
  func.func @transform_2(%arg0: i32, %arg1: memref<4xi32, #tpu.memory_space<smem>>) -> (i32, i32, i32) {
    %c0_i32 = arith.constant 0 : i32
    %c0_i32_0 = arith.constant 0 : i32
    %c0_i32_1 = arith.constant 0 : i32
    %c0_i32_2 = arith.constant 0 : i32
    return %c0_i32, %c0_i32_0, %c0_i32_1 : i32, i32, i32
  }
  func.func @transform_3(%arg0: i32, %arg1: memref<4xi32, #tpu.memory_space<smem>>) -> (i32, i32, i32) {
    %c0_i32 = arith.constant 0 : i32
    %c0_i32_0 = arith.constant 0 : i32
    %c0_i32_1 = arith.constant 0 : i32
    %c0_i32_2 = arith.constant 0 : i32
    return %c0_i32, %c0_i32_0, %c0_i32_1 : i32, i32, i32
  }
  func.func @transform_4(%arg0: i32, %arg1: memref<4xi32, #tpu.memory_space<smem>>) -> (i32, i32, i32) {
    %c0_i32 = arith.constant 0 : i32
    %c0_i32_0 = arith.constant 0 : i32
    %c0_i32_1 = arith.constant 0 : i32
    %c0_i32_2 = arith.constant 0 : i32
    return %c0_i32, %c0_i32_0, %c0_i32_1 : i32, i32, i32
  }
  func.func @transform_5(%arg0: i32, %arg1: memref<4xi32, #tpu.memory_space<smem>>) -> (i32, i32, i32) {
    %c0_i32 = arith.constant 0 : i32
    %c0_i32_0 = arith.constant 0 : i32
    %c0_i32_1 = arith.constant 0 : i32
    %c0_i32_2 = arith.constant 0 : i32
    return %c0_i32, %c0_i32_0, %c0_i32_1 : i32, i32, i32
  }
  func.func @transform_6(%arg0: i32, %arg1: memref<4xi32, #tpu.memory_space<smem>>) -> (i32, i32) {
    %c0_i32 = arith.constant 0 : i32
    %c0_i32_0 = arith.constant 0 : i32
    return %arg0, %c0_i32 : i32, i32
  }
}

</mosaic_0001>

<llo_original>
// kernel: tpu_custom_call.1
$region0: #{tpu_custom_call.1}
  #allocation0 [shape = 'u32[]', space=smem, size = 0x4, offset = 0x4, fixed_abs, tag = 'smem constant byte address 0x4 - core index']
  #allocation1 [shape = 'u32[144,128]{1,0:T(1,128)}', space=vmem, size = 0x12000, scoped, tag = 'internal scratch']
  #allocation2 [shape = 'f32[8,32]{1,0:T(8,128)}', space=vmem, size = 0x1000, scoped, tag = 'scratch operand']
  #allocation3 [shape = 's32[1]{0}', space=sflag, size = 0x4, scoped, tag = 'scoped memory for tpu_custom_call.1']
  #allocation4 [shape = 'u8[512]{0}', space=smem, size = 0x200, scoped, tag = 'prefetched SMEM operand 0']
  %s0 = inlined_call_operand.vmem [shape: s32[4], index: 0, kind: input, shape index: {}]
  %s1 = inlined_call_operand.vmem [shape: f32[16,32], index: 1, kind: input, shape index: {}]
  %s2 = inlined_call_operand.vmem [shape: f32[16,4], index: 2, kind: input, shape index: {}]
  %s3 = inlined_call_operand.vmem [shape: f32[4,32,64], index: 3, kind: input, shape index: {}]
  %s4 = inlined_call_operand.vmem [shape: f32[4,1,64], index: 4, kind: input, shape index: {}]
  %s5 = inlined_call_operand.vmem [shape: f32[4,64,32], index: 5, kind: input, shape index: {}]
  %s6 = inlined_call_operand.vmem [shape: f32[4,1,32], index: 6, kind: input, shape index: {}]
  %s7 = inlined_call_operand.hbm [shape: f32[16,32], index: 7, kind: output, shape index: {}]
  %s8 = sld [smem:[#allocation0]]
  $region73: #{tpu_custom_call.1} parent=0
    _
  %s10 = ssub.s32 1, %s8
  %s11 = scalar_select 0, %s10, %s8
  %s12 = sshll.u32 %s0, 4
  %s13 = int_to_ptr.vmem [resolvable:$true] %s12
  %15 = dma.vmem_to_smem %s13, 16, [#allocation4], [#allocation3]
  %16 = dma.done [#allocation3], 16
  %17 = sfence
  $region1: #{tpu_custom_call.1} parent=0
    #allocation5 [shape = 'u8[8192]{0}', space=vmem, size = 0x2000, scoped, tag = 'output window, operand 0']
    #allocation6 [shape = 's32[2]{0}', space=sflag, size = 0x8, scoped, tag = 'scoped memory for tpu_custom_call.1']
    %18 = vsyncpa [#allocation6], 0
    %s19 = scalar_lea.sflag [#allocation6], 1
    %20 = vsyncpa %s19, 0
    loop: start=0, step=1, limit=4
    $region2: #{tpu_custom_call.1} parent=1 // loop_pre_header
      _
    $region3: #{tpu_custom_call.1} parent=1 // loop_header
      %s22 = sphi 0, %s26
      %p23 = scmp.ge.s32.totalorder %s22, 4
      %s32 = sphi 0, %s34
      %s35 = sphi 0, %s32
      %s36 = sphi 0, %s35
      %s52 = sphi 0, %s36
      %s58 = sphi 0, %s60
      %s61 = sphi 0, %s58
      %s62 = sphi 0, %s61
      %s78 = sphi 0, %s62
      %s82 = sphi 0, %s82
      %s84 = sphi 0, %s82
      %s85 = sphi 0, %s84
      %s99 = sphi 0, %s85
      %s103 = sphi 0, %s103
      %s105 = sphi 0, %s103
      %s106 = sphi 0, %s105
      %s120 = sphi 0, %s106
      %s124 = sphi 0, %s124
      %s126 = sphi 0, %s124
      %s127 = sphi 0, %s126
      %s141 = sphi 0, %s127
      %s145 = sphi 0, %s145
      %s147 = sphi 0, %s145
      %s148 = sphi 0, %s147
      %s162 = sphi 0, %s148
      %s168 = sphi 0, %s170
      %s171 = sphi 0, %s168
      %s172 = sphi 0, %s171
      %s188 = sphi 0, %s172
    $region4: #{tpu_custom_call.1} parent=1 // loop_header_branch
      %25 = sbr.rel (%p23) target = $region8
    $region5: #{tpu_custom_call.1} parent=1 // loop_body
      %s27 = ssub.s32 %s22, 1
      %s28 = ssub.s32 %s22, 2
      %s29 = sadd.s32 %s22, 1
      %s30 = ssub.s32 %s22, %s29
      %p31 = scmp.eq.s32.totalorder %s30, 0
      %s33 = sadd.s32 %s32, 1
      %s34 = scalar_select %p31, %s32, %s33
      %p37 = pneg %p31
      %p38 = scmp.eq.s32.totalorder %s22, 1
      %p39 = por %p37, %p38
      %p40 = scmp.ne.s32.totalorder %s32, %s35
      %p41 = scmp.eq.s32.totalorder %s22, 0
      %p42 = por %p40, %p41
      %p43 = scmp.ne.s32.totalorder %s32, %s35
      %p44 = scmp.eq.s32.totalorder %s27, 1
      %p45 = por %p43, %p44
      %p46 = scmp.ne.s32.totalorder %s35, %s36
      %p47 = scmp.eq.s32.totalorder %s27, 0
      %p48 = por %p46, %p47
      %p49 = scmp.ne.s32.totalorder %s35, %s36
      %p50 = scmp.eq.s32.totalorder %s28, 1
      %p51 = por %p49, %p50
      %p53 = scmp.ne.s32.totalorder %s36, %s52
      %p54 = scmp.eq.s32.totalorder %s28, 0
      %p55 = por %p53, %p54
      %s56 = ssub.s32 %s22, %s29
      %p57 = scmp.eq.s32.totalorder %s56, 0
      %s59 = sadd.s32 %s58, 1
      %s60 = scalar_select %p57, %s58, %s59
      %p63 = pneg %p57
      %p64 = scmp.eq.s32.totalorder %s22, 1
      %p65 = por %p63, %p64
      %p66 = scmp.ne.s32.totalorder %s58, %s61
      %p67 = scmp.eq.s32.totalorder %s22, 0
      %p68 = por %p66, %p67
      %p69 = scmp.ne.s32.totalorder %s58, %s61
      %p70 = scmp.eq.s32.totalorder %s27, 1
      %p71 = por %p69, %p70
      %p72 = scmp.ne.s32.totalorder %s61, %s62
      %p73 = scmp.eq.s32.totalorder %s27, 0
      %p74 = por %p72, %p73
      %p75 = scmp.ne.s32.totalorder %s61, %s62
      %p76 = scmp.eq.s32.totalorder %s28, 1
      %p77 = por %p75, %p76
      %p79 = scmp.ne.s32.totalorder %s62, %s78
      %p80 = scmp.eq.s32.totalorder %s28, 0
      %p81 = por %p79, %p80
      %s83 = sadd.s32 %s82, 1
      %p86 = scmp.eq.s32.totalorder %s22, 1
      %p87 = scmp.ne.s32.totalorder %s82, %s84
      %p88 = scmp.eq.s32.totalorder %s22, 0
      %p89 = por %p87, %p88
      %p90 = scmp.ne.s32.totalorder %s82, %s84
      %p91 = scmp.eq.s32.totalorder %s27, 1
      %p92 = por %p90, %p91
      %p93 = scmp.ne.s32.totalorder %s84, %s85
      %p94 = scmp.eq.s32.totalorder %s27, 0
      %p95 = por %p93, %p94
      %p96 = scmp.ne.s32.totalorder %s84, %s85
      %p97 = scmp.eq.s32.totalorder %s28, 1
      %p98 = por %p96, %p97
      %p100 = scmp.ne.s32.totalorder %s85, %s99
      %p101 = scmp.eq.s32.totalorder %s28, 0
      %p102 = por %p100, %p101
      %s104 = sadd.s32 %s103, 1
      %p107 = scmp.eq.s32.totalorder %s22, 1
      %p108 = scmp.ne.s32.totalorder %s103, %s105
      %p109 = scmp.eq.s32.totalorder %s22, 0
      %p110 = por %p108, %p109
      %p111 = scmp.ne.s32.totalorder %s103, %s105
      %p112 = scmp.eq.s32.totalorder %s27, 1
      %p113 = por %p111, %p112
      %p114 = scmp.ne.s32.totalorder %s105, %s106
      %p115 = scmp.eq.s32.totalorder %s27, 0
      %p116 = por %p114, %p115
      %p117 = scmp.ne.s32.totalorder %s105, %s106
      %p118 = scmp.eq.s32.totalorder %s28, 1
      %p119 = por %p117, %p118
      %p121 = scmp.ne.s32.totalorder %s106, %s120
      %p122 = scmp.eq.s32.totalorder %s28, 0
      %p123 = por %p121, %p122
      %s125 = sadd.s32 %s124, 1
      %p128 = scmp.eq.s32.totalorder %s22, 1
      %p129 = scmp.ne.s32.totalorder %s124, %s126
      %p130 = scmp.eq.s32.totalorder %s22, 0
      %p131 = por %p129, %p130
      %p132 = scmp.ne.s32.totalorder %s124, %s126
      %p133 = scmp.eq.s32.totalorder %s27, 1
      %p134 = por %p132, %p133
      %p135 = scmp.ne.s32.totalorder %s126, %s127
      %p136 = scmp.eq.s32.totalorder %s27, 0
      %p137 = por %p135, %p136
      %p138 = scmp.ne.s32.totalorder %s126, %s127
      %p139 = scmp.eq.s32.totalorder %s28, 1
      %p140 = por %p138, %p139
      %p142 = scmp.ne.s32.totalorder %s127, %s141
      %p143 = scmp.eq.s32.totalorder %s28, 0
      %p144 = por %p142, %p143
      %s146 = sadd.s32 %s145, 1
      %p149 = scmp.eq.s32.totalorder %s22, 1
      %p150 = scmp.ne.s32.totalorder %s145, %s147
      %p151 = scmp.eq.s32.totalorder %s22, 0
      %p152 = por %p150, %p151
      %p153 = scmp.ne.s32.totalorder %s145, %s147
      %p154 = scmp.eq.s32.totalorder %s27, 1
      %p155 = por %p153, %p154
      %p156 = scmp.ne.s32.totalorder %s147, %s148
      %p157 = scmp.eq.s32.totalorder %s27, 0
      %p158 = por %p156, %p157
      %p159 = scmp.ne.s32.totalorder %s147, %s148
      %p160 = scmp.eq.s32.totalorder %s28, 1
      %p161 = por %p159, %p160
      %p163 = scmp.ne.s32.totalorder %s148, %s162
      %p164 = scmp.eq.s32.totalorder %s28, 0
      %p165 = por %p163, %p164
      %s166 = ssub.s32 %s22, %s29
      %p167 = scmp.eq.s32.totalorder %s166, 0
      %s169 = sadd.s32 %s168, 1
      %s170 = scalar_select %p167, %s168, %s169
      %p173 = pneg %p167
      %p174 = scmp.eq.s32.totalorder %s22, 1
      %p175 = por %p173, %p174
      %p176 = scmp.ne.s32.totalorder %s168, %s171
      %p177 = scmp.eq.s32.totalorder %s22, 0
      %p178 = por %p176, %p177
      %p179 = scmp.ne.s32.totalorder %s168, %s171
      %p180 = scmp.eq.s32.totalorder %s27, 1
      %p181 = por %p179, %p180
      %p182 = scmp.ne.s32.totalorder %s171, %s172
      %p183 = scmp.eq.s32.totalorder %s27, 0
      %p184 = por %p182, %p183
      %p185 = scmp.ne.s32.totalorder %s171, %s172
      %p186 = scmp.eq.s32.totalorder %s28, 1
      %p187 = por %p185, %p186
      %p189 = scmp.ne.s32.totalorder %s172, %s188
      %p190 = scmp.eq.s32.totalorder %s28, 0
      %p191 = por %p189, %p190
      %p192 = scmp.le.s32.totalorder 1, %s22
      %p193 = scmp.lt.s32.totalorder %s22, 3
      %p194 = pnand %p192, %p193
      %p195 = pneg %p194
      // Predicated region
      $region9: #{tpu_custom_call.1} parent=5 // pred_check
        _
      $region10: #{tpu_custom_call.1} parent=5 // pred_check_branch
        %197 = sbr.rel (%p194) target = $region12
      $region11: #{tpu_custom_call.1} parent=5 // pred_region
        %s198 = ssub.s32 %s22, 1
        // Predicated region
        $region13: #{tpu_custom_call.1} parent=11 // pred_check
          %p199 = pneg %p95
        $region14: #{tpu_custom_call.1} parent=11 // pred_check_branch
          %201 = sbr.rel (%p199) target = $region16
        $region15: #{tpu_custom_call.1} parent=11 // pred_region
          _
        $region16: #{tpu_custom_call.1} parent=11 // pred_fallthru
          _
        // Predicated region
        $region17: #{tpu_custom_call.1} parent=11 // pred_check
          %p202 = pneg %p116
        $region18: #{tpu_custom_call.1} parent=11 // pred_check_branch
          %204 = sbr.rel (%p202) target = $region20
        $region19: #{tpu_custom_call.1} parent=11 // pred_region
          _
        $region20: #{tpu_custom_call.1} parent=11 // pred_fallthru
          _
        // Predicated region
        $region21: #{tpu_custom_call.1} parent=11 // pred_check
          %p205 = pneg %p137
        $region22: #{tpu_custom_call.1} parent=11 // pred_check_branch
          %207 = sbr.rel (%p205) target = $region24
        $region23: #{tpu_custom_call.1} parent=11 // pred_region
          _
        $region24: #{tpu_custom_call.1} parent=11 // pred_fallthru
          _
        // Predicated region
        $region25: #{tpu_custom_call.1} parent=11 // pred_check
          %p208 = pneg %p158
        $region26: #{tpu_custom_call.1} parent=11 // pred_check_branch
          %210 = sbr.rel (%p208) target = $region28
        $region27: #{tpu_custom_call.1} parent=11 // pred_region
          _
        $region28: #{tpu_custom_call.1} parent=11 // pred_fallthru
          _
      $region12: #{tpu_custom_call.1} parent=5 // pred_fallthru
        _
      %p211 = scmp.lt.s32.totalorder %s22, 2
      // Predicated region
      $region29: #{tpu_custom_call.1} parent=5 // pred_check
        %p212 = pneg %p211
      $region30: #{tpu_custom_call.1} parent=5 // pred_check_branch
        %214 = sbr.rel (%p212) target = $region32
      $region31: #{tpu_custom_call.1} parent=5 // pred_region
        // Predicated region
        $region33: #{tpu_custom_call.1} parent=31 // pred_check
          %p215 = pneg %p42
        $region34: #{tpu_custom_call.1} parent=31 // pred_check_branch
          %217 = sbr.rel (%p215) target = $region36
        $region35: #{tpu_custom_call.1} parent=31 // pred_region
          %p218 = scmp.lt.s32.totalorder %s22, 1
          %s219 = scalar_select %p218, %s22, 1
          %s220 = smul.addr %s219, 8
          %s221 = scalar_lea.vmem %s1, %s220
        $region36: #{tpu_custom_call.1} parent=31 // pred_fallthru
          _
        // Predicated region
        $region37: #{tpu_custom_call.1} parent=31 // pred_check
          %p222 = pneg %p68
        $region38: #{tpu_custom_call.1} parent=31 // pred_check_branch
          %224 = sbr.rel (%p222) target = $region40
        $region39: #{tpu_custom_call.1} parent=31 // pred_region
          %p225 = scmp.lt.s32.totalorder %s22, 1
          %s226 = scalar_select %p225, %s22, 1
          %s227 = smul.addr %s226, 8
          %s228 = scalar_lea.vmem %s2, %s227
        $region40: #{tpu_custom_call.1} parent=31 // pred_fallthru
          _
      $region32: #{tpu_custom_call.1} parent=5 // pred_fallthru
        _
      %p229 = scmp.le.s32.totalorder 1, %s22
      %p230 = scmp.lt.s32.totalorder %s22, 3
      %p231 = pnand %p229, %p230
      %p232 = pneg %p231
      // Predicated region
      $region41: #{tpu_custom_call.1} parent=5 // pred_check
        _
      $region42: #{tpu_custom_call.1} parent=5 // pred_check_branch
        %234 = sbr.rel (%p231) target = $region44
      $region43: #{tpu_custom_call.1} parent=5 // pred_region
        %s235 = ssub.s32 %s22, 1
        %p236 = scmp.lt.s32.totalorder %s27, 1
        %s237 = scalar_select %p236, %s27, 1
        %s238 = smul.addr %s237, 8
        %s239 = scalar_lea.vmem %s1, %s238
        %p240 = pneg %p48
        %p241 = pneg %p45
        %p242 = scmp.lt.s32.totalorder %s27, 1
        %s243 = scalar_select %p242, %s27, 1
        %s244 = smul.addr %s243, 8
        %s245 = scalar_lea.vmem %s2, %s244
        %p246 = pneg %p74
        %p247 = pneg %p71
        %p248 = pneg %p95
        %p249 = pneg %p92
        %p250 = pneg %p116
        %p251 = pneg %p113
        %p252 = pneg %p137
        %p253 = pneg %p134
        %p254 = pneg %p158
        %p255 = pneg %p155
        %p256 = pneg %p184
        %p257 = pneg %p181
        %s258 = sand.u32 %s171, 1
        %s259 = scalar_lea.sflag [#allocation6], %s258
        %s260 = sand.u32 %s171, 1
        %s261 = smul.addr %s260, 8
        %s262 = scalar_lea.vmem [#allocation5], %s261
        %p263 = scmp.lt.s32.totalorder %s27, 1
        %s264 = scalar_select %p263, %s27, 1
        %s265 = smul.addr %s264, 8
        %s266 = scalar_lea.vmem %s1, %s265
        %p267 = scmp.lt.s32.totalorder %s27, 1
        %s268 = scalar_select %p267, %s27, 1
        %s269 = smul.addr %s268, 8
        %s270 = scalar_lea.vmem %s2, %s269
        %vm271 = vcmask 261120
        %272 = vst.msk [vmem:[#allocation2] sm:$0xff] %vm271, 0.0
        %v273 = vld [vmem:[%s266] sm:$0xff]
        %s274 = sld [smem:[#allocation4]]
        %p275 = scmp.ne.s32.totalorder %s274, 0
        // Predicated region
        $region45: #{tpu_custom_call.1} parent=43 // pred_check
          %p276 = pneg %p275
        $region46: #{tpu_custom_call.1} parent=43 // pred_check_branch
          %278 = sbr.rel (%p276) target = $region48
        $region47: #{tpu_custom_call.1} parent=43 // pred_region
          %v279 = vld [vmem:[%s270] sm:$0xff]
          %v280 = vld [vmem:[%s3] sm:$0xff]
          %v281 = vld [vmem:[%s3 + $0x8] sm:$0xff]
          %v282 = vld [vmem:[%s3 + $0x10] sm:$0xff]
          %v283 = vld [vmem:[%s3 + $0x18] sm:$0xff]
          %v284 = vld [vmem:[%s4] sm:$0x1]
          %v286 = vlaneseq
          %v287 = vshrl.u32 %v286, 7
          %v288 = vsub.s32 0, %v287
          %v289 = vrot.slane %v284, %v288
          %v292 = vsel %vm271, %v273, 0
          %294 = vmatprep.subr.mxu0 0.0
          %295 = vmatpush1.msra.mxu0 %v280
          %296 = vmatprep.subr.mxu0 0.0
          %297 = vmatpush1.msra.mxu0 %v281
          %298 = vmatprep.subr.mxu0 0.0
          %299 = vmatpush1.msra.mxu0 %v282
          %300 = vmatprep.subr.mxu0 0.0
          %301 = vmatpush1.msra.mxu0 %v283
          %302 = vmatprep.subr.mxu0 0.0
          %303 = vmatpush1.msra.mxu0 0.0
          %304 = vmatprep.subr.mxu0 0.0
          %305 = vmatpush1.msra.mxu0 0.0
          %306 = vmatprep.subr.mxu0 0.0
          %307 = vmatpush1.msra.mxu0 0.0
          %308 = vmatprep.subr.mxu0 0.0
          %309 = vmatpush1.msra.mxu0 0.0
          %310 = vmatprep.subr.mxu0 0.0
          %311 = vmatpush1.msra.mxu0 0.0
          %312 = vmatprep.subr.mxu0 0.0
          %313 = vmatpush1.msra.mxu0 0.0
          %314 = vmatprep.subr.mxu0 0.0
          %315 = vmatpush1.msra.mxu0 0.0
          %316 = vmatprep.subr.mxu0 0.0
          %317 = vmatpush1.msra.mxu0 0.0
          %318 = vmatprep.subr.mxu0 0.0
          %319 = vmatpush1.msra.mxu0 0.0
          %320 = vmatprep.subr.mxu0 0.0
          %321 = vmatpush1.msra.mxu0 0.0
          %322 = vmatprep.subr.mxu0 0.0
          %323 = vmatpush1.msra.mxu0 0.0
          %324 = vmatprep.subr.mxu0 0.0
          %325 = vmatpush1.msra.mxu0 0.0
          %326 = vmatprep.subr.mxu0 0.0
          %327 = vmatpush1.msra.mxu0 0.0
          %328 = vmatprep.subr.mxu0 0.0
          %329 = vmatpush1.msra.mxu0 0.0
          %330 = vmatprep.subr.mxu0 0.0
          %331 = vmatpush1.msra.mxu0 0.0
          %332 = vmatprep.subr.mxu0 0.0
          %333 = vmatpush1.msra.mxu0 0.0
          %334 = vmatprep.subr.mxu0 0.0
          %335 = vmatpush1.msra.mxu0 0.0
          %336 = vmatprep.subr.mxu0 0.0
          %337 = vmatpush1.msra.mxu0 0.0
          %338 = vmatprep.subr.mxu0 0.0
          %339 = vmatpush1.msra.mxu0 0.0
          %340 = vmatprep.subr.mxu0 0.0
          %341 = vmatpush1.msra.mxu0 0.0
          %342 = vmatprep.subr.mxu0 0.0
          %343 = vmatpush1.msra.mxu0 0.0
          %344 = vmatprep.subr.mxu0 0.0
          %345 = vmatpush1.msra.mxu0 0.0
          %346 = vmatprep.subr.mxu0 0.0
          %347 = vmatpush1.msra.mxu0 0.0
          %348 = vmatprep.subr.mxu0 0.0
          %349 = vmatpush1.msra.mxu0 0.0
          %350 = vmatprep.subr.mxu0 0.0
          %351 = vmatpush1.msra.mxu0 0.0
          %352 = vmatprep.subr.mxu0 0.0
          %353 = vmatpush1.msra.mxu0 0.0
          %354 = vmatprep.subr.mxu0 0.0
          %355 = vmatpush1.msra.mxu0 0.0
          %356 = vmatprep.subr.mxu0 0.0
          %357 = vmatpush1.msra.mxu0 0.0
          %358 = vmatprep.mubr.f32.mxu0 0.0
          %359 = vmatmul.mubr.f32.gmra.mrb[0].mxu0 %v292
          %v360 = vpop.f32.mrb[0].mxu0
          %v361 = vadd.f32 %v289, %v360
          %v362 = vpop.f32.mrb[0].mxu0
          %363 = vdwg.mxu0
          %v364 = vmul.f32 %v361, %v361
          %v365 = vmul.f32 %v361, %v364
          %v366 = vmul.f32 %v365, 0.044715
          %v367 = vadd.f32 %v361, %v366
          %v368 = vmul.f32 %v367, 0.7978846
          %v369 = vtanh.pop %v368
          %v370 = vadd.f32 %v369, 1.0
          %v371 = vmul.f32 %v370, 0.5
          %v372 = vmul.f32 %v361, %v371
          %v373 = vld [vmem:[%s5] sm:$0xff]
          %v374 = vld [vmem:[%s5 + $0x8] sm:$0xff]
          %v375 = vld [vmem:[%s5 + $0x10] sm:$0xff]
          %v376 = vld [vmem:[%s5 + $0x18] sm:$0xff]
          %v377 = vld [vmem:[%s5 + $0x20] sm:$0xff]
          %v378 = vld [vmem:[%s5 + $0x28] sm:$0xff]
          %v379 = vld [vmem:[%s5 + $0x30] sm:$0xff]
          %v380 = vld [vmem:[%s5 + $0x38] sm:$0xff]
          %v381 = vld [vmem:[%s6] sm:$0x1]
          %v383 = vlaneseq
          %v384 = vshrl.u32 %v383, 7
          %v385 = vsub.s32 0, %v384
          %v386 = vrot.slane %v381, %v385
          %vm388 = vcmask 523264
          %v390 = vsel %vm388, %v372, 0
          %392 = vmatprep.subr.mxu0 0.0
          %393 = vmatpush1.msra.mxu0 %v373
          %394 = vmatprep.subr.mxu0 0.0
          %395 = vmatpush1.msra.mxu0 %v374
          %396 = vmatprep.subr.mxu0 0.0
          %397 = vmatpush1.msra.mxu0 %v375
          %398 = vmatprep.subr.mxu0 0.0
          %399 = vmatpush1.msra.mxu0 %v376
          %400 = vmatprep.subr.mxu0 0.0
          %401 = vmatpush1.msra.mxu0 %v377
          %402 = vmatprep.subr.mxu0 0.0
          %403 = vmatpush1.msra.mxu0 %v378
          %404 = vmatprep.subr.mxu0 0.0
          %405 = vmatpush1.msra.mxu0 %v379
          %406 = vmatprep.subr.mxu0 0.0
          %407 = vmatpush1.msra.mxu0 %v380
          %408 = vmatprep.subr.mxu0 0.0
          %409 = vmatpush1.msra.mxu0 0.0
          %410 = vmatprep.subr.mxu0 0.0
          %411 = vmatpush1.msra.mxu0 0.0
          %412 = vmatprep.subr.mxu0 0.0
          %413 = vmatpush1.msra.mxu0 0.0
          %414 = vmatprep.subr.mxu0 0.0
          %415 = vmatpush1.msra.mxu0 0.0
          %416 = vmatprep.subr.mxu0 0.0
          %417 = vmatpush1.msra.mxu0 0.0
          %418 = vmatprep.subr.mxu0 0.0
          %419 = vmatpush1.msra.mxu0 0.0
          %420 = vmatprep.subr.mxu0 0.0
          %421 = vmatpush1.msra.mxu0 0.0
          %422 = vmatprep.subr.mxu0 0.0
          %423 = vmatpush1.msra.mxu0 0.0
          %424 = vmatprep.subr.mxu0 0.0
          %425 = vmatpush1.msra.mxu0 0.0
          %426 = vmatprep.subr.mxu0 0.0
          %427 = vmatpush1.msra.mxu0 0.0
          %428 = vmatprep.subr.mxu0 0.0
          %429 = vmatpush1.msra.mxu0 0.0
          %430 = vmatprep.subr.mxu0 0.0
          %431 = vmatpush1.msra.mxu0 0.0
          %432 = vmatprep.subr.mxu0 0.0
          %433 = vmatpush1.msra.mxu0 0.0
          %434 = vmatprep.subr.mxu0 0.0
          %435 = vmatpush1.msra.mxu0 0.0
          %436 = vmatprep.subr.mxu0 0.0
          %437 = vmatpush1.msra.mxu0 0.0
          %438 = vmatprep.subr.mxu0 0.0
          %439 = vmatpush1.msra.mxu0 0.0
          %440 = vmatprep.subr.mxu0 0.0
          %441 = vmatpush1.msra.mxu0 0.0
          %442 = vmatprep.subr.mxu0 0.0
          %443 = vmatpush1.msra.mxu0 0.0
          %444 = vmatprep.subr.mxu0 0.0
          %445 = vmatpush1.msra.mxu0 0.0
          %446 = vmatprep.subr.mxu0 0.0
          %447 = vmatpush1.msra.mxu0 0.0
          %448 = vmatprep.subr.mxu0 0.0
          %449 = vmatpush1.msra.mxu0 0.0
          %450 = vmatprep.subr.mxu0 0.0
          %451 = vmatpush1.msra.mxu0 0.0
          %452 = vmatprep.subr.mxu0 0.0
          %453 = vmatpush1.msra.mxu0 0.0
          %454 = vmatprep.subr.mxu0 0.0
          %455 = vmatpush1.msra.mxu0 0.0
          %456 = vmatprep.mubr.f32.mxu0 0.0
          %457 = vmatmul.mubr.f32.gmra.mrb[0].mxu0 %v390
          %v458 = vpop.f32.mrb[0].mxu0
          %v459 = vadd.f32 %v386, %v458
          %v460 = vpop.f32.mrb[0].mxu0
          %461 = vdwg.mxu0
          %v462 = vld [vmem:[#allocation2] sm:$0xff]
          %464 = vset.pattern.permute.xlu0 0
          %465 = vperm.xlu0 %464, %v279
          %v466 = vpop.permute.xlu0 %465
          %v468 = vmul.f32 %v466, %v459
          %v469 = vadd.f32 %v462, %v468
          %470 = vst.msk [vmem:[#allocation2] sm:$0xff] %vm271, %v469
        $region48: #{tpu_custom_call.1} parent=43 // pred_fallthru
          _
        %s471 = sld [smem:[#allocation4 + $0x1]]
        %p472 = scmp.ne.s32.totalorder %s471, 0
        // Predicated region
        $region49: #{tpu_custom_call.1} parent=43 // pred_check
          %p473 = pneg %p472
        $region50: #{tpu_custom_call.1} parent=43 // pred_check_branch
          %475 = sbr.rel (%p473) target = $region52
        $region51: #{tpu_custom_call.1} parent=43 // pred_region
          %v476 = vld [vmem:[%s270] sm:$0xff]
          %s477 = scalar_lea.vmem %s3, 32
          %v478 = vld [vmem:[%s477] sm:$0xff]
          %v479 = vld [vmem:[%s477 + $0x8] sm:$0xff]
          %v480 = vld [vmem:[%s477 + $0x10] sm:$0xff]
          %v481 = vld [vmem:[%s477 + $0x18] sm:$0xff]
          %s482 = scalar_lea.vmem %s4, 1
          %v483 = vld [vmem:[%s482] sm:$0x1]
          %v485 = vlaneseq
          %v486 = vshrl.u32 %v485, 7
          %v487 = vsub.s32 0, %v486
          %v488 = vrot.slane %v483, %v487
          %v491 = vsel %vm271, %v273, 0
          %493 = vmatprep.subr.mxu0 0.0
          %494 = vmatpush1.msra.mxu0 %v478
          %495 = vmatprep.subr.mxu0 0.0
          %496 = vmatpush1.msra.mxu0 %v479
          %497 = vmatprep.subr.mxu0 0.0
          %498 = vmatpush1.msra.mxu0 %v480
          %499 = vmatprep.subr.mxu0 0.0
          %500 = vmatpush1.msra.mxu0 %v481
          %501 = vmatprep.subr.mxu0 0.0
          %502 = vmatpush1.msra.mxu0 0.0
          %503 = vmatprep.subr.mxu0 0.0
          %504 = vmatpush1.msra.mxu0 0.0
          %505 = vmatprep.subr.mxu0 0.0
          %506 = vmatpush1.msra.mxu0 0.0
          %507 = vmatprep.subr.mxu0 0.0
          %508 = vmatpush1.msra.mxu0 0.0
          %509 = vmatprep.subr.mxu0 0.0
          %510 = vmatpush1.msra.mxu0 0.0
          %511 = vmatprep.subr.mxu0 0.0
          %512 = vmatpush1.msra.mxu0 0.0
          %513 = vmatprep.subr.mxu0 0.0
          %514 = vmatpush1.msra.mxu0 0.0
          %515 = vmatprep.subr.mxu0 0.0
          %516 = vmatpush1.msra.mxu0 0.0
          %517 = vmatprep.subr.mxu0 0.0
          %518 = vmatpush1.msra.mxu0 0.0
          %519 = vmatprep.subr.mxu0 0.0
          %520 = vmatpush1.msra.mxu0 0.0
          %521 = vmatprep.subr.mxu0 0.0
          %522 = vmatpush1.msra.mxu0 0.0
          %523 = vmatprep.subr.mxu0 0.0
          %524 = vmatpush1.msra.mxu0 0.0
          %525 = vmatprep.subr.mxu0 0.0
          %526 = vmatpush1.msra.mxu0 0.0
          %527 = vmatprep.subr.mxu0 0.0
          %528 = vmatpush1.msra.mxu0 0.0
          %529 = vmatprep.subr.mxu0 0.0
          %530 = vmatpush1.msra.mxu0 0.0
          %531 = vmatprep.subr.mxu0 0.0
          %532 = vmatpush1.msra.mxu0 0.0
          %533 = vmatprep.subr.mxu0 0.0
          %534 = vmatpush1.msra.mxu0 0.0
          %535 = vmatprep.subr.mxu0 0.0
          %536 = vmatpush1.msra.mxu0 0.0
          %537 = vmatprep.subr.mxu0 0.0
          %538 = vmatpush1.msra.mxu0 0.0
          %539 = vmatprep.subr.mxu0 0.0
          %540 = vmatpush1.msra.mxu0 0.0
          %541 = vmatprep.subr.mxu0 0.0
          %542 = vmatpush1.msra.mxu0 0.0
          %543 = vmatprep.subr.mxu0 0.0
          %544 = vmatpush1.msra.mxu0 0.0
          %545 = vmatprep.subr.mxu0 0.0
          %546 = vmatpush1.msra.mxu0 0.0
          %547 = vmatprep.subr.mxu0 0.0
          %548 = vmatpush1.msra.mxu0 0.0
          %549 = vmatprep.subr.mxu0 0.0
          %550 = vmatpush1.msra.mxu0 0.0
          %551 = vmatprep.subr.mxu0 0.0
          %552 = vmatpush1.msra.mxu0 0.0
          %553 = vmatprep.subr.mxu0 0.0
          %554 = vmatpush1.msra.mxu0 0.0
          %555 = vmatprep.subr.mxu0 0.0
          %556 = vmatpush1.msra.mxu0 0.0
          %557 = vmatprep.mubr.f32.mxu0 0.0
          %558 = vmatmul.mubr.f32.gmra.mrb[0].mxu0 %v491
          %v559 = vpop.f32.mrb[0].mxu0
          %v560 = vadd.f32 %v488, %v559
          %v561 = vpop.f32.mrb[0].mxu0
          %562 = vdwg.mxu0
          %v563 = vmul.f32 %v560, %v560
          %v564 = vmul.f32 %v560, %v563
          %v565 = vmul.f32 %v564, 0.044715
          %v566 = vadd.f32 %v560, %v565
          %v567 = vmul.f32 %v566, 0.7978846
          %v568 = vtanh.pop %v567
          %v569 = vadd.f32 %v568, 1.0
          %v570 = vmul.f32 %v569, 0.5
          %v571 = vmul.f32 %v560, %v570
          %s572 = scalar_lea.vmem %s5, 64
          %v573 = vld [vmem:[%s572] sm:$0xff]
          %v574 = vld [vmem:[%s572 + $0x8] sm:$0xff]
          %v575 = vld [vmem:[%s572 + $0x10] sm:$0xff]
          %v576 = vld [vmem:[%s572 + $0x18] sm:$0xff]
          %v577 = vld [vmem:[%s572 + $0x20] sm:$0xff]
          %v578 = vld [vmem:[%s572 + $0x28] sm:$0xff]
          %v579 = vld [vmem:[%s572 + $0x30] sm:$0xff]
          %v580 = vld [vmem:[%s572 + $0x38] sm:$0xff]
          %s581 = scalar_lea.vmem %s6, 1
          %v582 = vld [vmem:[%s581] sm:$0x1]
          %v584 = vlaneseq
          %v585 = vshrl.u32 %v584, 7
          %v586 = vsub.s32 0, %v585
          %v587 = vrot.slane %v582, %v586
          %vm589 = vcmask 523264
          %v591 = vsel %vm589, %v571, 0
          %593 = vmatprep.subr.mxu0 0.0
          %594 = vmatpush1.msra.mxu0 %v573
          %595 = vmatprep.subr.mxu0 0.0
          %596 = vmatpush1.msra.mxu0 %v574
          %597 = vmatprep.subr.mxu0 0.0
          %598 = vmatpush1.msra.mxu0 %v575
          %599 = vmatprep.subr.mxu0 0.0
          %600 = vmatpush1.msra.mxu0 %v576
          %601 = vmatprep.subr.mxu0 0.0
          %602 = vmatpush1.msra.mxu0 %v577
          %603 = vmatprep.subr.mxu0 0.0
          %604 = vmatpush1.msra.mxu0 %v578
          %605 = vmatprep.subr.mxu0 0.0
          %606 = vmatpush1.msra.mxu0 %v579
          %607 = vmatprep.subr.mxu0 0.0
          %608 = vmatpush1.msra.mxu0 %v580
          %609 = vmatprep.subr.mxu0 0.0
          %610 = vmatpush1.msra.mxu0 0.0
          %611 = vmatprep.subr.mxu0 0.0
          %612 = vmatpush1.msra.mxu0 0.0
          %613 = vmatprep.subr.mxu0 0.0
          %614 = vmatpush1.msra.mxu0 0.0
          %615 = vmatprep.subr.mxu0 0.0
          %616 = vmatpush1.msra.mxu0 0.0
          %617 = vmatprep.subr.mxu0 0.0
          %618 = vmatpush1.msra.mxu0 0.0
          %619 = vmatprep.subr.mxu0 0.0
          %620 = vmatpush1.msra.mxu0 0.0
          %621 = vmatprep.subr.mxu0 0.0
          %622 = vmatpush1.msra.mxu0 0.0
          %623 = vmatprep.subr.mxu0 0.0
          %624 = vmatpush1.msra.mxu0 0.0
          %625 = vmatprep.subr.mxu0 0.0
          %626 = vmatpush1.msra.mxu0 0.0
          %627 = vmatprep.subr.mxu0 0.0
          %628 = vmatpush1.msra.mxu0 0.0
          %629 = vmatprep.subr.mxu0 0.0
          %630 = vmatpush1.msra.mxu0 0.0
          %631 = vmatprep.subr.mxu0 0.0
          %632 = vmatpush1.msra.mxu0 0.0
          %633 = vmatprep.subr.mxu0 0.0
          %634 = vmatpush1.msra.mxu0 0.0
          %635 = vmatprep.subr.mxu0 0.0
          %636 = vmatpush1.msra.mxu0 0.0
          %637 = vmatprep.subr.mxu0 0.0
          %638 = vmatpush1.msra.mxu0 0.0
          %639 = vmatprep.subr.mxu0 0.0
          %640 = vmatpush1.msra.mxu0 0.0
          %641 = vmatprep.subr.mxu0 0.0
          %642 = vmatpush1.msra.mxu0 0.0
          %643 = vmatprep.subr.mxu0 0.0
          %644 = vmatpush1.msra.mxu0 0.0
          %645 = vmatprep.subr.mxu0 0.0
          %646 = vmatpush1.msra.mxu0 0.0
          %647 = vmatprep.subr.mxu0 0.0
          %648 = vmatpush1.msra.mxu0 0.0
          %649 = vmatprep.subr.mxu0 0.0
          %650 = vmatpush1.msra.mxu0 0.0
          %651 = vmatprep.subr.mxu0 0.0
          %652 = vmatpush1.msra.mxu0 0.0
          %653 = vmatprep.subr.mxu0 0.0
          %654 = vmatpush1.msra.mxu0 0.0
          %655 = vmatprep.subr.mxu0 0.0
          %656 = vmatpush1.msra.mxu0 0.0
          %657 = vmatprep.mubr.f32.mxu0 0.0
          %658 = vmatmul.mubr.f32.gmra.mrb[0].mxu0 %v591
          %v659 = vpop.f32.mrb[0].mxu0
          %v660 = vadd.f32 %v587, %v659
          %v661 = vpop.f32.mrb[0].mxu0
          %662 = vdwg.mxu0
          %v663 = vld [vmem:[#allocation2] sm:$0xff]
          %665 = vset.pattern.permute.xlu0 1
          %666 = vperm.xlu0 %665, %v476
          %v667 = vpop.permute.xlu0 %666
          %v669 = vmul.f32 %v667, %v660
          %v670 = vadd.f32 %v663, %v669
          %671 = vst.msk [vmem:[#allocation2] sm:$0xff] %vm271, %v670
        $region52: #{tpu_custom_call.1} parent=43 // pred_fallthru
          _
        %s672 = sld [smem:[#allocation4 + $0x2]]
        %p673 = scmp.ne.s32.totalorder %s672, 0
        // Predicated region
        $region53: #{tpu_custom_call.1} parent=43 // pred_check
          %p674 = pneg %p673
        $region54: #{tpu_custom_call.1} parent=43 // pred_check_branch
          %676 = sbr.rel (%p674) target = $region56
        $region55: #{tpu_custom_call.1} parent=43 // pred_region
          %v677 = vld [vmem:[%s270] sm:$0xff]
          %s678 = scalar_lea.vmem %s3, 64
          %v679 = vld [vmem:[%s678] sm:$0xff]
          %v680 = vld [vmem:[%s678 + $0x8] sm:$0xff]
          %v681 = vld [vmem:[%s678 + $0x10] sm:$0xff]
          %v682 = vld [vmem:[%s678 + $0x18] sm:$0xff]
          %s683 = scalar_lea.vmem %s4, 2
          %v684 = vld [vmem:[%s683] sm:$0x1]
          %v686 = vlaneseq
          %v687 = vshrl.u32 %v686, 7
          %v688 = vsub.s32 0, %v687
          %v689 = vrot.slane %v684, %v688
          %v692 = vsel %vm271, %v273, 0
          %694 = vmatprep.subr.mxu0 0.0
          %695 = vmatpush1.msra.mxu0 %v679
          %696 = vmatprep.subr.mxu0 0.0
          %697 = vmatpush1.msra.mxu0 %v680
          %698 = vmatprep.subr.mxu0 0.0
          %699 = vmatpush1.msra.mxu0 %v681
          %700 = vmatprep.subr.mxu0 0.0
          %701 = vmatpush1.msra.mxu0 %v682
          %702 = vmatprep.subr.mxu0 0.0
          %703 = vmatpush1.msra.mxu0 0.0
          %704 = vmatprep.subr.mxu0 0.0
          %705 = vmatpush1.msra.mxu0 0.0
          %706 = vmatprep.subr.mxu0 0.0
          %707 = vmatpush1.msra.mxu0 0.0
          %708 = vmatprep.subr.mxu0 0.0
          %709 = vmatpush1.msra.mxu0 0.0
          %710 = vmatprep.subr.mxu0 0.0
          %711 = vmatpush1.msra.mxu0 0.0
          %712 = vmatprep.subr.mxu0 0.0
          %713 = vmatpush1.msra.mxu0 0.0
          %714 = vmatprep.subr.mxu0 0.0
          %715 = vmatpush1.msra.mxu0 0.0
          %716 = vmatprep.subr.mxu0 0.0
          %717 = vmatpush1.msra.mxu0 0.0
          %718 = vmatprep.subr.mxu0 0.0
          %719 = vmatpush1.msra.mxu0 0.0
          %720 = vmatprep.subr.mxu0 0.0
          %721 = vmatpush1.msra.mxu0 0.0
          %722 = vmatprep.subr.mxu0 0.0
          %723 = vmatpush1.msra.mxu0 0.0
          %724 = vmatprep.subr.mxu0 0.0
          %725 = vmatpush1.msra.mxu0 0.0
          %726 = vmatprep.subr.mxu0 0.0
          %727 = vmatpush1.msra.mxu0 0.0
          %728 = vmatprep.subr.mxu0 0.0
          %729 = vmatpush1.msra.mxu0 0.0
          %730 = vmatprep.subr.mxu0 0.0
          %731 = vmatpush1.msra.mxu0 0.0
          %732 = vmatprep.subr.mxu0 0.0
          %733 = vmatpush1.msra.mxu0 0.0
          %734 = vmatprep.subr.mxu0 0.0
          %735 = vmatpush1.msra.mxu0 0.0
          %736 = vmatprep.subr.mxu0 0.0
          %737 = vmatpush1.msra.mxu0 0.0
          %738 = vmatprep.subr.mxu0 0.0
          %739 = vmatpush1.msra.mxu0 0.0
          %740 = vmatprep.subr.mxu0 0.0
          %741 = vmatpush1.msra.mxu0 0.0
          %742 = vmatprep.subr.mxu0 0.0
          %743 = vmatpush1.msra.mxu0 0.0
          %744 = vmatprep.subr.mxu0 0.0
          %745 = vmatpush1.msra.mxu0 0.0
          %746 = vmatprep.subr.mxu0 0.0
          %747 = vmatpush1.msra.mxu0 0.0
          %748 = vmatprep.subr.mxu0 0.0
          %749 = vmatpush1.msra.mxu0 0.0
          %750 = vmatprep.subr.mxu0 0.0
          %751 = vmatpush1.msra.mxu0 0.0
          %752 = vmatprep.subr.mxu0 0.0
          %753 = vmatpush1.msra.mxu0 0.0
          %754 = vmatprep.subr.mxu0 0.0
          %755 = vmatpush1.msra.mxu0 0.0
          %756 = vmatprep.subr.mxu0 0.0
          %757 = vmatpush1.msra.mxu0 0.0
          %758 = vmatprep.mubr.f32.mxu0 0.0
          %759 = vmatmul.mubr.f32.gmra.mrb[0].mxu0 %v692
          %v760 = vpop.f32.mrb[0].mxu0
          %v761 = vadd.f32 %v689, %v760
          %v762 = vpop.f32.mrb[0].mxu0
          %763 = vdwg.mxu0
          %v764 = vmul.f32 %v761, %v761
          %v765 = vmul.f32 %v761, %v764
          %v766 = vmul.f32 %v765, 0.044715
          %v767 = vadd.f32 %v761, %v766
          %v768 = vmul.f32 %v767, 0.7978846
          %v769 = vtanh.pop %v768
          %v770 = vadd.f32 %v769, 1.0
          %v771 = vmul.f32 %v770, 0.5
          %v772 = vmul.f32 %v761, %v771
          %s773 = scalar_lea.vmem %s5, 128
          %v774 = vld [vmem:[%s773] sm:$0xff]
          %v775 = vld [vmem:[%s773 + $0x8] sm:$0xff]
          %v776 = vld [vmem:[%s773 + $0x10] sm:$0xff]
          %v777 = vld [vmem:[%s773 + $0x18] sm:$0xff]
          %v778 = vld [vmem:[%s773 + $0x20] sm:$0xff]
          %v779 = vld [vmem:[%s773 + $0x28] sm:$0xff]
          %v780 = vld [vmem:[%s773 + $0x30] sm:$0xff]
          %v781 = vld [vmem:[%s773 + $0x38] sm:$0xff]
          %s782 = scalar_lea.vmem %s6, 2
          %v783 = vld [vmem:[%s782] sm:$0x1]
          %v785 = vlaneseq
          %v786 = vshrl.u32 %v785, 7
          %v787 = vsub.s32 0, %v786
          %v788 = vrot.slane %v783, %v787
          %vm790 = vcmask 523264
          %v792 = vsel %vm790, %v772, 0
          %794 = vmatprep.subr.mxu0 0.0
          %795 = vmatpush1.msra.mxu0 %v774
          %796 = vmatprep.subr.mxu0 0.0
          %797 = vmatpush1.msra.mxu0 %v775
          %798 = vmatprep.subr.mxu0 0.0
          %799 = vmatpush1.msra.mxu0 %v776
          %800 = vmatprep.subr.mxu0 0.0
          %801 = vmatpush1.msra.mxu0 %v777
          %802 = vmatprep.subr.mxu0 0.0
          %803 = vmatpush1.msra.mxu0 %v778
          %804 = vmatprep.subr.mxu0 0.0
          %805 = vmatpush1.msra.mxu0 %v779
          %806 = vmatprep.subr.mxu0 0.0
          %807 = vmatpush1.msra.mxu0 %v780
          %808 = vmatprep.subr.mxu0 0.0
          %809 = vmatpush1.msra.mxu0 %v781
          %810 = vmatprep.subr.mxu0 0.0
          %811 = vmatpush1.msra.mxu0 0.0
          %812 = vmatprep.subr.mxu0 0.0
          %813 = vmatpush1.msra.mxu0 0.0
          %814 = vmatprep.subr.mxu0 0.0
          %815 = vmatpush1.msra.mxu0 0.0
          %816 = vmatprep.subr.mxu0 0.0
          %817 = vmatpush1.msra.mxu0 0.0
          %818 = vmatprep.subr.mxu0 0.0
          %819 = vmatpush1.msra.mxu0 0.0
          %820 = vmatprep.subr.mxu0 0.0
          %821 = vmatpush1.msra.mxu0 0.0
          %822 = vmatprep.subr.mxu0 0.0
          %823 = vmatpush1.msra.mxu0 0.0
          %824 = vmatprep.subr.mxu0 0.0
          %825 = vmatpush1.msra.mxu0 0.0
          %826 = vmatprep.subr.mxu0 0.0
          %827 = vmatpush1.msra.mxu0 0.0
          %828 = vmatprep.subr.mxu0 0.0
          %829 = vmatpush1.msra.mxu0 0.0
          %830 = vmatprep.subr.mxu0 0.0
          %831 = vmatpush1.msra.mxu0 0.0
          %832 = vmatprep.subr.mxu0 0.0
          %833 = vmatpush1.msra.mxu0 0.0
          %834 = vmatprep.subr.mxu0 0.0
          %835 = vmatpush1.msra.mxu0 0.0
          %836 = vmatprep.subr.mxu0 0.0
          %837 = vmatpush1.msra.mxu0 0.0
          %838 = vmatprep.subr.mxu0 0.0
          %839 = vmatpush1.msra.mxu0 0.0
          %840 = vmatprep.subr.mxu0 0.0
          %841 = vmatpush1.msra.mxu0 0.0
          %842 = vmatprep.subr.mxu0 0.0
          %843 = vmatpush1.msra.mxu0 0.0
          %844 = vmatprep.subr.mxu0 0.0
          %845 = vmatpush1.msra.mxu0 0.0
          %846 = vmatprep.subr.mxu0 0.0
          %847 = vmatpush1.msra.mxu0 0.0
          %848 = vmatprep.subr.mxu0 0.0
          %849 = vmatpush1.msra.mxu0 0.0
          %850 = vmatprep.subr.mxu0 0.0
          %851 = vmatpush1.msra.mxu0 0.0
          %852 = vmatprep.subr.mxu0 0.0
          %853 = vmatpush1.msra.mxu0 0.0
          %854 = vmatprep.subr.mxu0 0.0
          %855 = vmatpush1.msra.mxu0 0.0
          %856 = vmatprep.subr.mxu0 0.0
          %857 = vmatpush1.msra.mxu0 0.0
          %858 = vmatprep.mubr.f32.mxu0 0.0
          %859 = vmatmul.mubr.f32.gmra.mrb[0].mxu0 %v792
          %v860 = vpop.f32.mrb[0].mxu0
          %v861 = vadd.f32 %v788, %v860
          %v862 = vpop.f32.mrb[0].mxu0
          %863 = vdwg.mxu0
          %v864 = vld [vmem:[#allocation2] sm:$0xff]
          %866 = vset.pattern.permute.xlu0 2
          %867 = vperm.xlu0 %866, %v677
          %v868 = vpop.permute.xlu0 %867
          %v870 = vmul.f32 %v868, %v861
          %v871 = vadd.f32 %v864, %v870
          %872 = vst.msk [vmem:[#allocation2] sm:$0xff] %vm271, %v871
        $region56: #{tpu_custom_call.1} parent=43 // pred_fallthru
          _
        %s873 = sld [smem:[#allocation4 + $0x3]]
        %p874 = scmp.ne.s32.totalorder %s873, 0
        // Predicated region
        $region57: #{tpu_custom_call.1} parent=43 // pred_check
          %p875 = pneg %p874
        $region58: #{tpu_custom_call.1} parent=43 // pred_check_branch
          %877 = sbr.rel (%p875) target = $region60
        $region59: #{tpu_custom_call.1} parent=43 // pred_region
          %v878 = vld [vmem:[%s270] sm:$0xff]
          %s879 = scalar_lea.vmem %s3, 96
          %v880 = vld [vmem:[%s879] sm:$0xff]
          %v881 = vld [vmem:[%s879 + $0x8] sm:$0xff]
          %v882 = vld [vmem:[%s879 + $0x10] sm:$0xff]
          %v883 = vld [vmem:[%s879 + $0x18] sm:$0xff]
          %s884 = scalar_lea.vmem %s4, 3
          %v885 = vld [vmem:[%s884] sm:$0x1]
          %v887 = vlaneseq
          %v888 = vshrl.u32 %v887, 7
          %v889 = vsub.s32 0, %v888
          %v890 = vrot.slane %v885, %v889
          %v893 = vsel %vm271, %v273, 0
          %895 = vmatprep.subr.mxu0 0.0
          %896 = vmatpush1.msra.mxu0 %v880
          %897 = vmatprep.subr.mxu0 0.0
          %898 = vmatpush1.msra.mxu0 %v881
          %899 = vmatprep.subr.mxu0 0.0
          %900 = vmatpush1.msra.mxu0 %v882
          %901 = vmatprep.subr.mxu0 0.0
          %902 = vmatpush1.msra.mxu0 %v883
          %903 = vmatprep.subr.mxu0 0.0
          %904 = vmatpush1.msra.mxu0 0.0
          %905 = vmatprep.subr.mxu0 0.0
          %906 = vmatpush1.msra.mxu0 0.0
          %907 = vmatprep.subr.mxu0 0.0
          %908 = vmatpush1.msra.mxu0 0.0
          %909 = vmatprep.subr.mxu0 0.0
          %910 = vmatpush1.msra.mxu0 0.0
          %911 = vmatprep.subr.mxu0 0.0
          %912 = vmatpush1.msra.mxu0 0.0
          %913 = vmatprep.subr.mxu0 0.0
          %914 = vmatpush1.msra.mxu0 0.0
          %915 = vmatprep.subr.mxu0 0.0
          %916 = vmatpush1.msra.mxu0 0.0
          %917 = vmatprep.subr.mxu0 0.0
          %918 = vmatpush1.msra.mxu0 0.0
          %919 = vmatprep.subr.mxu0 0.0
          %920 = vmatpush1.msra.mxu0 0.0
          %921 = vmatprep.subr.mxu0 0.0
          %922 = vmatpush1.msra.mxu0 0.0
          %923 = vmatprep.subr.mxu0 0.0
          %924 = vmatpush1.msra.mxu0 0.0
          %925 = vmatprep.subr.mxu0 0.0
          %926 = vmatpush1.msra.mxu0 0.0
          %927 = vmatprep.subr.mxu0 0.0
          %928 = vmatpush1.msra.mxu0 0.0
          %929 = vmatprep.subr.mxu0 0.0
          %930 = vmatpush1.msra.mxu0 0.0
          %931 = vmatprep.subr.mxu0 0.0
          %932 = vmatpush1.msra.mxu0 0.0
          %933 = vmatprep.subr.mxu0 0.0
          %934 = vmatpush1.msra.mxu0 0.0
          %935 = vmatprep.subr.mxu0 0.0
          %936 = vmatpush1.msra.mxu0 0.0
          %937 = vmatprep.subr.mxu0 0.0
          %938 = vmatpush1.msra.mxu0 0.0
          %939 = vmatprep.subr.mxu0 0.0
          %940 = vmatpush1.msra.mxu0 0.0
          %941 = vmatprep.subr.mxu0 0.0
          %942 = vmatpush1.msra.mxu0 0.0
          %943 = vmatprep.subr.mxu0 0.0
          %944 = vmatpush1.msra.mxu0 0.0
          %945 = vmatprep.subr.mxu0 0.0
          %946 = vmatpush1.msra.mxu0 0.0
          %947 = vmatprep.subr.mxu0 0.0
          %948 = vmatpush1.msra.mxu0 0.0
          %949 = vmatprep.subr.mxu0 0.0
          %950 = vmatpush1.msra.mxu0 0.0
          %951 = vmatprep.subr.mxu0 0.0
          %952 = vmatpush1.msra.mxu0 0.0
          %953 = vmatprep.subr.mxu0 0.0
          %954 = vmatpush1.msra.mxu0 0.0
          %955 = vmatprep.subr.mxu0 0.0
          %956 = vmatpush1.msra.mxu0 0.0
          %957 = vmatprep.subr.mxu0 0.0
          %958 = vmatpush1.msra.mxu0 0.0
          %959 = vmatprep.mubr.f32.mxu0 0.0
          %960 = vmatmul.mubr.f32.gmra.mrb[0].mxu0 %v893
          %v961 = vpop.f32.mrb[0].mxu0
          %v962 = vadd.f32 %v890, %v961
          %v963 = vpop.f32.mrb[0].mxu0
          %964 = vdwg.mxu0
          %v965 = vmul.f32 %v962, %v962
          %v966 = vmul.f32 %v962, %v965
          %v967 = vmul.f32 %v966, 0.044715
          %v968 = vadd.f32 %v962, %v967
          %v969 = vmul.f32 %v968, 0.7978846
          %v970 = vtanh.pop %v969
          %v971 = vadd.f32 %v970, 1.0
          %v972 = vmul.f32 %v971, 0.5
          %v973 = vmul.f32 %v962, %v972
          %s974 = scalar_lea.vmem %s5, 192
          %v975 = vld [vmem:[%s974] sm:$0xff]
          %v976 = vld [vmem:[%s974 + $0x8] sm:$0xff]
          %v977 = vld [vmem:[%s974 + $0x10] sm:$0xff]
          %v978 = vld [vmem:[%s974 + $0x18] sm:$0xff]
          %v979 = vld [vmem:[%s974 + $0x20] sm:$0xff]
          %v980 = vld [vmem:[%s974 + $0x28] sm:$0xff]
          %v981 = vld [vmem:[%s974 + $0x30] sm:$0xff]
          %v982 = vld [vmem:[%s974 + $0x38] sm:$0xff]
          %s983 = scalar_lea.vmem %s6, 3
          %v984 = vld [vmem:[%s983] sm:$0x1]
          %v986 = vlaneseq
          %v987 = vshrl.u32 %v986, 7
          %v988 = vsub.s32 0, %v987
          %v989 = vrot.slane %v984, %v988
          %vm991 = vcmask 523264
          %v993 = vsel %vm991, %v973, 0
          %995 = vmatprep.subr.mxu0 0.0
          %996 = vmatpush1.msra.mxu0 %v975
          %997 = vmatprep.subr.mxu0 0.0
          %998 = vmatpush1.msra.mxu0 %v976
          %999 = vmatprep.subr.mxu0 0.0
          %1000 = vmatpush1.msra.mxu0 %v977
          %1001 = vmatprep.subr.mxu0 0.0
          %1002 = vmatpush1.msra.mxu0 %v978
          %1003 = vmatprep.subr.mxu0 0.0
          %1004 = vmatpush1.msra.mxu0 %v979
          %1005 = vmatprep.subr.mxu0 0.0
          %1006 = vmatpush1.msra.mxu0 %v980
          %1007 = vmatprep.subr.mxu0 0.0
          %1008 = vmatpush1.msra.mxu0 %v981
          %1009 = vmatprep.subr.mxu0 0.0
          %1010 = vmatpush1.msra.mxu0 %v982
          %1011 = vmatprep.subr.mxu0 0.0
          %1012 = vmatpush1.msra.mxu0 0.0
          %1013 = vmatprep.subr.mxu0 0.0
          %1014 = vmatpush1.msra.mxu0 0.0
          %1015 = vmatprep.subr.mxu0 0.0
          %1016 = vmatpush1.msra.mxu0 0.0
          %1017 = vmatprep.subr.mxu0 0.0
          %1018 = vmatpush1.msra.mxu0 0.0
          %1019 = vmatprep.subr.mxu0 0.0
          %1020 = vmatpush1.msra.mxu0 0.0
          %1021 = vmatprep.subr.mxu0 0.0
          %1022 = vmatpush1.msra.mxu0 0.0
          %1023 = vmatprep.subr.mxu0 0.0
          %1024 = vmatpush1.msra.mxu0 0.0
          %1025 = vmatprep.subr.mxu0 0.0
          %1026 = vmatpush1.msra.mxu0 0.0
          %1027 = vmatprep.subr.mxu0 0.0
          %1028 = vmatpush1.msra.mxu0 0.0
          %1029 = vmatprep.subr.mxu0 0.0
          %1030 = vmatpush1.msra.mxu0 0.0
          %1031 = vmatprep.subr.mxu0 0.0
          %1032 = vmatpush1.msra.mxu0 0.0
          %1033 = vmatprep.subr.mxu0 0.0
          %1034 = vmatpush1.msra.mxu0 0.0
          %1035 = vmatprep.subr.mxu0 0.0
          %1036 = vmatpush1.msra.mxu0 0.0
          %1037 = vmatprep.subr.mxu0 0.0
          %1038 = vmatpush1.msra.mxu0 0.0
          %1039 = vmatprep.subr.mxu0 0.0
          %1040 = vmatpush1.msra.mxu0 0.0
          %1041 = vmatprep.subr.mxu0 0.0
          %1042 = vmatpush1.msra.mxu0 0.0
          %1043 = vmatprep.subr.mxu0 0.0
          %1044 = vmatpush1.msra.mxu0 0.0
          %1045 = vmatprep.subr.mxu0 0.0
          %1046 = vmatpush1.msra.mxu0 0.0
          %1047 = vmatprep.subr.mxu0 0.0
          %1048 = vmatpush1.msra.mxu0 0.0
          %1049 = vmatprep.subr.mxu0 0.0
          %1050 = vmatpush1.msra.mxu0 0.0
          %1051 = vmatprep.subr.mxu0 0.0
          %1052 = vmatpush1.msra.mxu0 0.0
          %1053 = vmatprep.subr.mxu0 0.0
          %1054 = vmatpush1.msra.mxu0 0.0
          %1055 = vmatprep.subr.mxu0 0.0
          %1056 = vmatpush1.msra.mxu0 0.0
          %1057 = vmatprep.subr.mxu0 0.0
          %1058 = vmatpush1.msra.mxu0 0.0
          %1059 = vmatprep.mubr.f32.mxu0 0.0
          %1060 = vmatmul.mubr.f32.gmra.mrb[0].mxu0 %v993
          %v1061 = vpop.f32.mrb[0].mxu0
          %v1062 = vadd.f32 %v989, %v1061
          %v1063 = vpop.f32.mrb[0].mxu0
          %1064 = vdwg.mxu0
          %v1065 = vld [vmem:[#allocation2] sm:$0xff]
          %1067 = vset.pattern.permute.xlu0 3
          %1068 = vperm.xlu0 %1067, %v878
          %v1069 = vpop.permute.xlu0 %1068
          %v1071 = vmul.f32 %v1069, %v1062
          %v1072 = vadd.f32 %v1065, %v1071
          %1073 = vst.msk [vmem:[#allocation2] sm:$0xff] %vm271, %v1072
        $region60: #{tpu_custom_call.1} parent=43 // pred_fallthru
          _
        %v1074 = vld [vmem:[#allocation2] sm:$0xff]
        %1075 = vst.msk [vmem:[%s262] sm:$0xff] %vm271, %v1074
        %s1076 = sand.u32 %s171, 1
        %s1077 = scalar_lea.sflag [#allocation6], %s1076
        %s1078 = sand.u32 %s171, 1
        %s1079 = smul.addr %s1078, 8
        %s1080 = scalar_lea.vmem [#allocation5], %s1079
        // Predicated region
        $region61: #{tpu_custom_call.1} parent=43 // pred_check
          %p1081 = pneg %p181
        $region62: #{tpu_custom_call.1} parent=43 // pred_check_branch
          %1083 = sbr.rel (%p1081) target = $region64
        $region63: #{tpu_custom_call.1} parent=43 // pred_region
          %s1085 = ssub.s32 128, 128
          %1086 = vsyncadd %s1077, %s1085
          %s1087 = smul.addr %s27, 128
          %s1088 = scalar_lea.hbm %s7, %s1087
          %s1090 = sshll.u32 %s1080, 4
          %s1091 = int_to_ptr.vmem [resolvable:$true] %s1090
          %1093 = dma.vmem_to_hbm [thread:$0]  %s1091, 128, %s1088, %s1077
        $region64: #{tpu_custom_call.1} parent=43 // pred_fallthru
          _
      $region44: #{tpu_custom_call.1} parent=5 // pred_fallthru
        _
      %p1094 = scmp.le.s32.totalorder 2, %s22
      // Predicated region
      $region65: #{tpu_custom_call.1} parent=5 // pred_check
        %p1095 = pneg %p1094
      $region66: #{tpu_custom_call.1} parent=5 // pred_check_branch
        %1097 = sbr.rel (%p1095) target = $region68
      $region67: #{tpu_custom_call.1} parent=5 // pred_region
        %s1098 = ssub.s32 %s22, 2
        // Predicated region
        $region69: #{tpu_custom_call.1} parent=67 // pred_check
          %p1099 = pneg %p187
        $region70: #{tpu_custom_call.1} parent=67 // pred_check_branch
          %1101 = sbr.rel (%p1099) target = $region72
        $region71: #{tpu_custom_call.1} parent=67 // pred_region
          %s1102 = sand.u32 %s172, 1
          %s1103 = scalar_lea.sflag [#allocation6], %s1102
          %s1104 = sand.u32 %s172, 1
          %s1105 = smul.addr %s1104, 8
          %s1106 = scalar_lea.vmem [#allocation5], %s1105
          %1107 = dma.done %s1103, 128
        $region72: #{tpu_custom_call.1} parent=67 // pred_fallthru
          _
      $region68: #{tpu_custom_call.1} parent=5 // pred_fallthru
        _
    $region6: #{tpu_custom_call.1} parent=1 // loop_footer
      %s26 = sadd.s32 1, %s22
    $region7: #{tpu_custom_call.1} parent=1 // loop_footer_branch
      %21 = sbr.rel target = $region3
    $region8: #{tpu_custom_call.1} parent=1 // loop_exit
      _
    %1108 = vsyncpa [#allocation6], 1
    %s1109 = scalar_lea.sflag [#allocation6], 1
    %1110 = vsyncpa %s1109, 1

</llo_original>
